<compile_context>
chip_gen: v5e
topology: v5e:2x2
jax: 0.10.0
libtpu: 0.0.40
codegen_flags: <defaults>
</compile_context>

<pallas_src>
import functools
import math

import jax
import jax.numpy as jnp
from jax.experimental import pallas as pl
from jax.experimental.pallas import tpu as pltpu


def _strided_conv_kernel(ee0_ref, eo0_ref, oe1_ref, oo1_ref, ee2_ref, eo2_ref,
                         w_ref, b_ref, o_ref, p_ref, *,
                         th, wo, cin, k9, k9p, is_relu):
    """One grid step: assemble patches^T (k9p, th*wo) in a VMEM scratch (spatial on
    lanes, taps*Cin on sublanes), one MXU GEMM against the resident (Cop, k9p)
    weight, fused bias + ReLU, channels-first lane-dense store."""
    # Zero the padded contraction rows so they contribute nothing to the GEMM
    # (scratch VMEM is uninitialized and persists across grid steps).
    if k9p > k9:
        p_ref[k9:, :] = jnp.zeros((k9p - k9, th * wo), dtype=p_ref.dtype)

    # kh = 0 -> even input rows, kh = 1 -> odd rows, kh = 2 -> even rows shifted by 1.
    kh_planes = ((ee0_ref, eo0_ref), (oe1_ref, oo1_ref), (ee2_ref, eo2_ref))
    for r in range(th):                      # static unroll, th kept small (<= 16)
        col = r * wo
        k = 0
        for pe_ref, po_ref in kh_planes:
            row_e = pe_ref[:, r, :]          # (cin, wo+1): one load, two windows
            row_o = po_ref[:, r, :]          # (cin, wo)
            p_ref[k:k + cin, col:col + wo] = row_e[:, :wo]               # kw = 0
            p_ref[k + cin:k + 2 * cin, col:col + wo] = row_o             # kw = 1
            p_ref[k + 2 * cin:k + 3 * cin, col:col + wo] = row_e[:, 1:]  # kw = 2
            k += 3 * cin

    y = jnp.dot(w_ref[...], p_ref[...], preferred_element_type=jnp.float32)
    y = y + b_ref[...]                       # (Cop, M) + (Cop, 1) broadcast
    if is_relu:
        y = jnp.maximum(y, 0.0)
    o_ref[...] = y.astype(o_ref.dtype)


def strided_pool2d(x_nchw, weight_oihw, bias, *, kernel_size=3, stride=2,
                   padding=1, is_relu=True, target_lanes=512, max_unroll_rows=16,
                   compute_dtype=jnp.float32):
    """Forward pass of StridedPool2d. x_nchw: (N, Cin, H, W) -> (N, Cout, Ho, Wo)."""
    N, Cin, H, W = x_nchw.shape
    Cout, Cin_w, KH, KW = weight_oihw.shape
    # TODO(synk): only the module default config (kernel_size=3, stride=2, padding=1)
    # is implemented; the parity-plane decomposition assumes stride == 2, k == 3.
    assert kernel_size == 3 and stride == 2 and padding == 1 and KH == 3 and KW == 3
    assert Cin_w == Cin

    Ho = (H + 2 * padding - KH) // stride + 1
    Wo = (W + 2 * padding - KW) // stride + 1
    out_dtype = x_nchw.dtype

    # ---- Row-block / lane sizing --------------------------------------------------
    # th output rows per grid step; the flattened out block (Cop, th*wo_c) must be
    # lane-dense (th*wo_c % 128 == 0) or span the full spatial extent, and th must be
    # sublane-aligned (x8) or span the full height.
    limit = min(Ho, max_unroll_rows)
    valid = [c for c in range(8, limit + 1, 8) if (c * Wo) % 128 == 0]
    if valid:
        big = [c for c in valid if c * Wo >= target_lanes]
        th = min(big) if big else max(valid)
        wo_c = Wo
    elif Ho <= max_unroll_rows:
        th = Ho                         # single row block: full-extent blocks
        wo_c = Wo
    else:
        th = 8                          # pad width so an 8-row block is lane-dense
        wo_c = -(-Wo // 16) * 16
    n_rb = -(-Ho // th)
    Ho_pad = n_rb * th
    M = th * wo_c

    # ---- Parity-plane views (channels-first, no transpose, no gather) -------------
    # The padded input must expose rows 0..2*Ho_pad and cols 0..2*wo_c (inclusive).
    pad_b = max(padding, 2 * Ho_pad + 1 - (H + padding))
    pad_r = max(padding, 2 * wo_c + 1 - (W + padding))
    xp = jnp.pad(x_nchw, ((0, 0), (0, 0), (padding, pad_b), (padding, pad_r)))
    xp = xp.astype(compute_dtype)

    rows_e = xp[:, :, 0:2 * Ho_pad:2, :]        # kh = 0
    rows_o = xp[:, :, 1:2 * Ho_pad:2, :]        # kh = 1
    rows_e1 = xp[:, :, 2:2 * Ho_pad + 1:2, :]   # kh = 2

    def col_split(p):                            # kw-even / kw-odd planes
        return p[..., 0:2 * wo_c + 1:2], p[..., 1:2 * wo_c:2]

    ee0, eo0 = col_split(rows_e)
    oe1, oo1 = col_split(rows_o)
    ee2, eo2 = col_split(rows_e1)

    # ---- Weights / bias: (Cout, Cin, 3, 3) -> (Cop, K9p), channels on sublanes ----
    K9 = KH * KW * Cin
    K9p = -(-K9 // 8) * 8
    Cop = -(-Cout // 8) * 8
    w2 = jnp.transpose(weight_oihw, (0, 2, 3, 1)).reshape(Cout, K9)  # (kh, kw, cin)
    w2 = jnp.pad(w2, ((0, Cop - Cout), (0, K9p - K9))).astype(compute_dtype)
    b2 = jnp.pad(bias.astype(jnp.float32), (0, Cop - Cout)).reshape(Cop, 1)

    # ---- Cost estimate / VMEM budgeting -------------------------------------------
    itm = jnp.dtype(compute_dtype).itemsize
    out_itm = jnp.dtype(out_dtype).itemsize
    plane_bytes = (3 * N * Cin * Ho_pad * (wo_c + 1)
                   + 3 * N * Cin * Ho_pad * wo_c) * itm
    cost = pl.CostEstimate(
        flops=int(2 * N * n_rb * Cop * M * K9p),
        transcendentals=0,
        bytes_accessed=int(plane_bytes + w2.size * itm + b2.size * 4
                           + N * Cop * Ho_pad * wo_c * out_itm))

    in_blk = (3 * Cin * th * (wo_c + 1) + 3 * Cin * th * wo_c) * itm
    working_set = (2 * in_blk + 2 * Cop * M * out_itm
                   + 2 * (Cop * K9p * itm + Cop * 4) + K9p * M * itm)
    vmem_limit = None
    if working_set > 24 * 1024 * 1024:           # only override the scoped default
        vmem_limit = int(min(working_set + (8 << 20), 64 << 20))  # v7x-safe cap

    kernel = functools.partial(_strided_conv_kernel, th=th, wo=wo_c, cin=Cin,
                               k9=K9, k9p=K9p, is_relu=is_relu)

    plane_spec_e = pl.BlockSpec((pl.Squeezed(), Cin, th, wo_c + 1),
                                lambda n, rb: (n, 0, rb, 0))
    plane_spec_o = pl.BlockSpec((pl.Squeezed(), Cin, th, wo_c),
                                lambda n, rb: (n, 0, rb, 0))

    out = pl.pallas_call(
        kernel,
        out_shape=jax.ShapeDtypeStruct((N, Cop, Ho_pad * wo_c), out_dtype),
        grid_spec=pltpu.PrefetchScalarGridSpec(
            num_scalar_prefetch=0,
            grid=(N, n_rb),
            in_specs=[
                plane_spec_e, plane_spec_o,                      # kh = 0
                plane_spec_e, plane_spec_o,                      # kh = 1
                plane_spec_e, plane_spec_o,                      # kh = 2
                pl.BlockSpec((Cop, K9p), lambda n, rb: (0, 0)),  # resident weights
                pl.BlockSpec((Cop, 1), lambda n, rb: (0, 0)),    # resident bias
            ],
            out_specs=pl.BlockSpec((pl.Squeezed(), Cop, M),
                                   lambda n, rb: (n, 0, rb)),
            scratch_shapes=[pltpu.VMEM((K9p, M), compute_dtype)],
        ),
        compiler_params=pltpu.CompilerParams(
            dimension_semantics=("parallel", "parallel"),
            vmem_limit_bytes=vmem_limit),
        cost_estimate=cost,
    )(ee0, eo0, oe1, oo1, ee2, eo2, w2, b2)

    # Channels-first already: just un-flatten the spatial dim and slice the padding.
    y = out.reshape(N, Cop, Ho_pad, wo_c)[:, :Cout, :Ho, :Wo]
    return y.astype(x_nchw.dtype)


if __name__ == "__main__":
    key = jax.random.PRNGKey(0)
    k1, k2, k3 = jax.random.split(key, 3)

    N, Cin, H, W = 2, 4, 16, 16
    Cout, K = 8, 3
    x = jax.random.normal(k1, (N, Cin, H, W), dtype=jnp.float32)

    # Same param shapes as nn.Conv2d(in, out, 3, stride=2, padding=1).
    fan_in = Cin * K * K
    bound = 1.0 / (fan_in ** 0.5)
    weight = jax.random.uniform(k2, (Cout, Cin, K, K), jnp.float32, -bound, bound)
    bias = jax.random.uniform(k3, (Cout,), jnp.float32, -bound, bound)

    fwd = jax.jit(lambda a, w, b: strided_pool2d(a, w, b, is_relu=True))
    y = jax.block_until_ready(fwd(x, weight, bias))

    # Cross-check against XLA conv (same semantics as PyTorch Conv2d + ReLU).
    ref = jax.lax.conv_general_dilated(
        x, weight, window_strides=(2, 2), padding=((1, 1), (1, 1)),
        dimension_numbers=("NCHW", "OIHW", "NCHW"),
        precision=jax.lax.Precision.HIGHEST)
    ref = jnp.maximum(ref + bias.reshape(1, Cout, 1, 1), 0.0)

    assert y.shape == (N, Cout, 8, 8), y.shape
    err = float(jnp.max(jnp.abs(y - ref)))
    assert jnp.allclose(y, ref, atol=1e-3, rtol=1e-3), err
    print("KERNEL_OK")
</pallas_src>

<mosaic_0001>
module attributes {stable_mosaic.version = 11 : i64} {
  func.func @_strided_conv_kernel(%arg0: i32, %arg1: i32, %arg2: memref<1x4x8x9xf32, #tpu.memory_space<vmem>>, %arg3: memref<1x4x8x8xf32, #tpu.memory_space<vmem>>, %arg4: memref<1x4x8x9xf32, #tpu.memory_space<vmem>>, %arg5: memref<1x4x8x8xf32, #tpu.memory_space<vmem>>, %arg6: memref<1x4x8x9xf32, #tpu.memory_space<vmem>>, %arg7: memref<1x4x8x8xf32, #tpu.memory_space<vmem>>, %arg8: memref<8x40xf32, #tpu.memory_space<vmem>>, %arg9: memref<8x1xf32, #tpu.memory_space<vmem>>, %arg10: memref<1x8x64xf32, #tpu.memory_space<vmem>>, %arg11: memref<40x64xf32, #tpu.memory_space<vmem>>) attributes {dimension_semantics = [#tpu.dimension_semantics<parallel>, #tpu.dimension_semantics<parallel>], iteration_bounds = array<i64: 2, 1>, scalar_prefetch = 0 : i64, scratch_operands = 1 : i64, tpu.core_type = #tpu.core_type<tc>, window_params = [{transform_indices = @transform_0, window_bounds = array<i64: 1, 4, 8, 9>}, {transform_indices = @transform_1, window_bounds = array<i64: 1, 4, 8, 8>}, {transform_indices = @transform_2, window_bounds = array<i64: 1, 4, 8, 9>}, {transform_indices = @transform_3, window_bounds = array<i64: 1, 4, 8, 8>}, {transform_indices = @transform_4, window_bounds = array<i64: 1, 4, 8, 9>}, {transform_indices = @transform_5, window_bounds = array<i64: 1, 4, 8, 8>}, {pipeline_mode = #tpu.pipeline_mode<synchronous>, transform_indices = @transform_6, window_bounds = array<i64: 8, 40>}, {pipeline_mode = #tpu.pipeline_mode<synchronous>, transform_indices = @transform_7, window_bounds = array<i64: 8, 1>}, {transform_indices = @transform_8, window_bounds = array<i64: 1, 8, 64>}]} {
    %cst = arith.constant 0.000000e+00 : f32
    %0 = vector.broadcast %cst : f32 to vector<4x64xf32>
    %c36 = arith.constant 36 : index
    %c0 = arith.constant 0 : index
    %1 = vector.load %arg11[%c36, %c0] : memref<40x64xf32, #tpu.memory_space<vmem>>, vector<4x64xf32>
    tpu.vector_store %arg11[%c36, %c0], %0 {strides = array<i32>} : memref<40x64xf32, #tpu.memory_space<vmem>>, vector<4x64xf32>,
    %c0_0 = arith.constant 0 : index
    %c0_1 = arith.constant 0 : index
    %c0_2 = arith.constant 0 : index
    %c0_3 = arith.constant 0 : index
    %2 = vector.load %arg2[%c0_0, %c0_1, %c0_2, %c0_3] : memref<1x4x8x9xf32, #tpu.memory_space<vmem>>, vector<1x4x1x9xf32>
    %3 = vector.shape_cast %2 : vector<1x4x1x9xf32> to vector<4x9xf32>
    %c0_4 = arith.constant 0 : index
    %c0_5 = arith.constant 0 : index
    %c0_6 = arith.constant 0 : index
    %c0_7 = arith.constant 0 : index
    %4 = vector.load %arg3[%c0_4, %c0_5, %c0_6, %c0_7] : memref<1x4x8x8xf32, #tpu.memory_space<vmem>>, vector<1x4x1x8xf32>
    %5 = vector.shape_cast %4 : vector<1x4x1x8xf32> to vector<4x8xf32>
    %6 = vector.extract_strided_slice %3 {offsets = [0, 0], sizes = [4, 8], strides = [1, 1]} : vector<4x9xf32> to vector<4x8xf32>
    %c0_8 = arith.constant 0 : index
    %c0_9 = arith.constant 0 : index
    %7 = vector.load %arg11[%c0_8, %c0_9] : memref<40x64xf32, #tpu.memory_space<vmem>>, vector<4x8xf32>
    tpu.vector_store %arg11[%c0_8, %c0_9], %6 {strides = array<i32>} : memref<40x64xf32, #tpu.memory_space<vmem>>, vector<4x8xf32>,
    %c4 = arith.constant 4 : index
    %c0_10 = arith.constant 0 : index
    %8 = vector.load %arg11[%c4, %c0_10] : memref<40x64xf32, #tpu.memory_space<vmem>>, vector<4x8xf32>
    tpu.vector_store %arg11[%c4, %c0_10], %5 {strides = array<i32>} : memref<40x64xf32, #tpu.memory_space<vmem>>, vector<4x8xf32>,
    %9 = vector.extract_strided_slice %3 {offsets = [0, 1], sizes = [4, 8], strides = [1, 1]} : vector<4x9xf32> to vector<4x8xf32>
    %c8 = arith.constant 8 : index
    %c0_11 = arith.constant 0 : index
    %10 = vector.load %arg11[%c8, %c0_11] : memref<40x64xf32, #tpu.memory_space<vmem>>, vector<4x8xf32>
    tpu.vector_store %arg11[%c8, %c0_11], %9 {strides = array<i32>} : memref<40x64xf32, #tpu.memory_space<vmem>>, vector<4x8xf32>,
    %c0_12 = arith.constant 0 : index
    %c0_13 = arith.constant 0 : index
    %c0_14 = arith.constant 0 : index
    %c0_15 = arith.constant 0 : index
    %11 = vector.load %arg4[%c0_12, %c0_13, %c0_14, %c0_15] : memref<1x4x8x9xf32, #tpu.memory_space<vmem>>, vector<1x4x1x9xf32>
    %12 = vector.shape_cast %11 : vector<1x4x1x9xf32> to vector<4x9xf32>
    %c0_16 = arith.constant 0 : index
    %c0_17 = arith.constant 0 : index
    %c0_18 = arith.constant 0 : index
    %c0_19 = arith.constant 0 : index
    %13 = vector.load %arg5[%c0_16, %c0_17, %c0_18, %c0_19] : memref<1x4x8x8xf32, #tpu.memory_space<vmem>>, vector<1x4x1x8xf32>
    %14 = vector.shape_cast %13 : vector<1x4x1x8xf32> to vector<4x8xf32>
    %15 = vector.extract_strided_slice %12 {offsets = [0, 0], sizes = [4, 8], strides = [1, 1]} : vector<4x9xf32> to vector<4x8xf32>
    %c12 = arith.constant 12 : index
    %c0_20 = arith.constant 0 : index
    %16 = vector.load %arg11[%c12, %c0_20] : memref<40x64xf32, #tpu.memory_space<vmem>>, vector<4x8xf32>
    tpu.vector_store %arg11[%c12, %c0_20], %15 {strides = array<i32>} : memref<40x64xf32, #tpu.memory_space<vmem>>, vector<4x8xf32>,
    %c16 = arith.constant 16 : index
    %c0_21 = arith.constant 0 : index
    %17 = vector.load %arg11[%c16, %c0_21] : memref<40x64xf32, #tpu.memory_space<vmem>>, vector<4x8xf32>
    tpu.vector_store %arg11[%c16, %c0_21], %14 {strides = array<i32>} : memref<40x64xf32, #tpu.memory_space<vmem>>, vector<4x8xf32>,
    %18 = vector.extract_strided_slice %12 {offsets = [0, 1], sizes = [4, 8], strides = [1, 1]} : vector<4x9xf32> to vector<4x8xf32>
    %c20 = arith.constant 20 : index
    %c0_22 = arith.constant 0 : index
    %19 = vector.load %arg11[%c20, %c0_22] : memref<40x64xf32, #tpu.memory_space<vmem>>, vector<4x8xf32>
    tpu.vector_store %arg11[%c20, %c0_22], %18 {strides = array<i32>} : memref<40x64xf32, #tpu.memory_space<vmem>>, vector<4x8xf32>,
    %c0_23 = arith.constant 0 : index
    %c0_24 = arith.constant 0 : index
    %c0_25 = arith.constant 0 : index
    %c0_26 = arith.constant 0 : index
    %20 = vector.load %arg6[%c0_23, %c0_24, %c0_25, %c0_26] : memref<1x4x8x9xf32, #tpu.memory_space<vmem>>, vector<1x4x1x9xf32>
    %21 = vector.shape_cast %20 : vector<1x4x1x9xf32> to vector<4x9xf32>
    %c0_27 = arith.constant 0 : index
    %c0_28 = arith.constant 0 : index
    %c0_29 = arith.constant 0 : index
    %c0_30 = arith.constant 0 : index
    %22 = vector.load %arg7[%c0_27, %c0_28, %c0_29, %c0_30] : memref<1x4x8x8xf32, #tpu.memory_space<vmem>>, vector<1x4x1x8xf32>
    %23 = vector.shape_cast %22 : vector<1x4x1x8xf32> to vector<4x8xf32>
    %24 = vector.extract_strided_slice %21 {offsets = [0, 0], sizes = [4, 8], strides = [1, 1]} : vector<4x9xf32> to vector<4x8xf32>
    %c24 = arith.constant 24 : index
    %c0_31 = arith.constant 0 : index
    %25 = vector.load %arg11[%c24, %c0_31] : memref<40x64xf32, #tpu.memory_space<vmem>>, vector<4x8xf32>
    tpu.vector_store %arg11[%c24, %c0_31], %24 {strides = array<i32>} : memref<40x64xf32, #tpu.memory_space<vmem>>, vector<4x8xf32>,
    %c28 = arith.constant 28 : index
    %c0_32 = arith.constant 0 : index
    %26 = vector.load %arg11[%c28, %c0_32] : memref<40x64xf32, #tpu.memory_space<vmem>>, vector<4x8xf32>
    tpu.vector_store %arg11[%c28, %c0_32], %23 {strides = array<i32>} : memref<40x64xf32, #tpu.memory_space<vmem>>, vector<4x8xf32>,
    %27 = vector.extract_strided_slice %21 {offsets = [0, 1], sizes = [4, 8], strides = [1, 1]} : vector<4x9xf32> to vector<4x8xf32>
    %c32 = arith.constant 32 : index
    %c0_33 = arith.constant 0 : index
    %28 = vector.load %arg11[%c32, %c0_33] : memref<40x64xf32, #tpu.memory_space<vmem>>, vector<4x8xf32>
    tpu.vector_store %arg11[%c32, %c0_33], %27 {strides = array<i32>} : memref<40x64xf32, #tpu.memory_space<vmem>>, vector<4x8xf32>,
    %c0_34 = arith.constant 0 : index
    %c0_35 = arith.constant 0 : index
    %c1 = arith.constant 1 : index
    %c0_36 = arith.constant 0 : index
    %29 = vector.load %arg2[%c0_34, %c0_35, %c1, %c0_36] : memref<1x4x8x9xf32, #tpu.memory_space<vmem>>, vector<1x4x1x9xf32>
    %30 = vector.shape_cast %29 : vector<1x4x1x9xf32> to vector<4x9xf32>
    %c0_37 = arith.constant 0 : index
    %c0_38 = arith.constant 0 : index
    %c1_39 = arith.constant 1 : index
    %c0_40 = arith.constant 0 : index
    %31 = vector.load %arg3[%c0_37, %c0_38, %c1_39, %c0_40] : memref<1x4x8x8xf32, #tpu.memory_space<vmem>>, vector<1x4x1x8xf32>
    %32 = vector.shape_cast %31 : vector<1x4x1x8xf32> to vector<4x8xf32>
    %33 = vector.extract_strided_slice %30 {offsets = [0, 0], sizes = [4, 8], strides = [1, 1]} : vector<4x9xf32> to vector<4x8xf32>
    %c0_41 = arith.constant 0 : index
    %c8_42 = arith.constant 8 : index
    %34 = vector.load %arg11[%c0_41, %c8_42] : memref<40x64xf32, #tpu.memory_space<vmem>>, vector<4x8xf32>
    tpu.vector_store %arg11[%c0_41, %c8_42], %33 {strides = array<i32>} : memref<40x64xf32, #tpu.memory_space<vmem>>, vector<4x8xf32>,
    %c4_43 = arith.constant 4 : index
    %c8_44 = arith.constant 8 : index
    %35 = vector.load %arg11[%c4_43, %c8_44] : memref<40x64xf32, #tpu.memory_space<vmem>>, vector<4x8xf32>
    tpu.vector_store %arg11[%c4_43, %c8_44], %32 {strides = array<i32>} : memref<40x64xf32, #tpu.memory_space<vmem>>, vector<4x8xf32>,
    %36 = vector.extract_strided_slice %30 {offsets = [0, 1], sizes = [4, 8], strides = [1, 1]} : vector<4x9xf32> to vector<4x8xf32>
    %c8_45 = arith.constant 8 : index
    %c8_46 = arith.constant 8 : index
    %37 = vector.load %arg11[%c8_45, %c8_46] : memref<40x64xf32, #tpu.memory_space<vmem>>, vector<4x8xf32>
    tpu.vector_store %arg11[%c8_45, %c8_46], %36 {strides = array<i32>} : memref<40x64xf32, #tpu.memory_space<vmem>>, vector<4x8xf32>,
    %c0_47 = arith.constant 0 : index
    %c0_48 = arith.constant 0 : index
    %c1_49 = arith.constant 1 : index
    %c0_50 = arith.constant 0 : index
    %38 = vector.load %arg4[%c0_47, %c0_48, %c1_49, %c0_50] : memref<1x4x8x9xf32, #tpu.memory_space<vmem>>, vector<1x4x1x9xf32>
    %39 = vector.shape_cast %38 : vector<1x4x1x9xf32> to vector<4x9xf32>
    %c0_51 = arith.constant 0 : index
    %c0_52 = arith.constant 0 : index
    %c1_53 = arith.constant 1 : index
    %c0_54 = arith.constant 0 : index
    %40 = vector.load %arg5[%c0_51, %c0_52, %c1_53, %c0_54] : memref<1x4x8x8xf32, #tpu.memory_space<vmem>>, vector<1x4x1x8xf32>
    %41 = vector.shape_cast %40 : vector<1x4x1x8xf32> to vector<4x8xf32>
    %42 = vector.extract_strided_slice %39 {offsets = [0, 0], sizes = [4, 8], strides = [1, 1]} : vector<4x9xf32> to vector<4x8xf32>
    %c12_55 = arith.constant 12 : index
    %c8_56 = arith.constant 8 : index
    %43 = vector.load %arg11[%c12_55, %c8_56] : memref<40x64xf32, #tpu.memory_space<vmem>>, vector<4x8xf32>
    tpu.vector_store %arg11[%c12_55, %c8_56], %42 {strides = array<i32>} : memref<40x64xf32, #tpu.memory_space<vmem>>, vector<4x8xf32>,
    %c16_57 = arith.constant 16 : index
    %c8_58 = arith.constant 8 : index
    %44 = vector.load %arg11[%c16_57, %c8_58] : memref<40x64xf32, #tpu.memory_space<vmem>>, vector<4x8xf32>
    tpu.vector_store %arg11[%c16_57, %c8_58], %41 {strides = array<i32>} : memref<40x64xf32, #tpu.memory_space<vmem>>, vector<4x8xf32>,
    %45 = vector.extract_strided_slice %39 {offsets = [0, 1], sizes = [4, 8], strides = [1, 1]} : vector<4x9xf32> to vector<4x8xf32>
    %c20_59 = arith.constant 20 : index
    %c8_60 = arith.constant 8 : index
    %46 = vector.load %arg11[%c20_59, %c8_60] : memref<40x64xf32, #tpu.memory_space<vmem>>, vector<4x8xf32>
    tpu.vector_store %arg11[%c20_59, %c8_60], %45 {strides = array<i32>} : memref<40x64xf32, #tpu.memory_space<vmem>>, vector<4x8xf32>,
    %c0_61 = arith.constant 0 : index
    %c0_62 = arith.constant 0 : index
    %c1_63 = arith.constant 1 : index
    %c0_64 = arith.constant 0 : index
    %47 = vector.load %arg6[%c0_61, %c0_62, %c1_63, %c0_64] : memref<1x4x8x9xf32, #tpu.memory_space<vmem>>, vector<1x4x1x9xf32>
    %48 = vector.shape_cast %47 : vector<1x4x1x9xf32> to vector<4x9xf32>
    %c0_65 = arith.constant 0 : index
    %c0_66 = arith.constant 0 : index
    %c1_67 = arith.constant 1 : index
    %c0_68 = arith.constant 0 : index
    %49 = vector.load %arg7[%c0_65, %c0_66, %c1_67, %c0_68] : memref<1x4x8x8xf32, #tpu.memory_space<vmem>>, vector<1x4x1x8xf32>
    %50 = vector.shape_cast %49 : vector<1x4x1x8xf32> to vector<4x8xf32>
    %51 = vector.extract_strided_slice %48 {offsets = [0, 0], sizes = [4, 8], strides = [1, 1]} : vector<4x9xf32> to vector<4x8xf32>
    %c24_69 = arith.constant 24 : index
    %c8_70 = arith.constant 8 : index
    %52 = vector.load %arg11[%c24_69, %c8_70] : memref<40x64xf32, #tpu.memory_space<vmem>>, vector<4x8xf32>
    tpu.vector_store %arg11[%c24_69, %c8_70], %51 {strides = array<i32>} : memref<40x64xf32, #tpu.memory_space<vmem>>, vector<4x8xf32>,
    %c28_71 = arith.constant 28 : index
    %c8_72 = arith.constant 8 : index
    %53 = vector.load %arg11[%c28_71, %c8_72] : memref<40x64xf32, #tpu.memory_space<vmem>>, vector<4x8xf32>
    tpu.vector_store %arg11[%c28_71, %c8_72], %50 {strides = array<i32>} : memref<40x64xf32, #tpu.memory_space<vmem>>, vector<4x8xf32>,
    %54 = vector.extract_strided_slice %48 {offsets = [0, 1], sizes = [4, 8], strides = [1, 1]} : vector<4x9xf32> to vector<4x8xf32>
    %c32_73 = arith.constant 32 : index
    %c8_74 = arith.constant 8 : index
    %55 = vector.load %arg11[%c32_73, %c8_74] : memref<40x64xf32, #tpu.memory_space<vmem>>, vector<4x8xf32>
    tpu.vector_store %arg11[%c32_73, %c8_74], %54 {strides = array<i32>} : memref<40x64xf32, #tpu.memory_space<vmem>>, vector<4x8xf32>,
    %c0_75 = arith.constant 0 : index
    %c0_76 = arith.constant 0 : index
    %c2 = arith.constant 2 : index
    %c0_77 = arith.constant 0 : index
    %56 = vector.load %arg2[%c0_75, %c0_76, %c2, %c0_77] : memref<1x4x8x9xf32, #tpu.memory_space<vmem>>, vector<1x4x1x9xf32>
    %57 = vector.shape_cast %56 : vector<1x4x1x9xf32> to vector<4x9xf32>
    %c0_78 = arith.constant 0 : index
    %c0_79 = arith.constant 0 : index
    %c2_80 = arith.constant 2 : index
    %c0_81 = arith.constant 0 : index
    %58 = vector.load %arg3[%c0_78, %c0_79, %c2_80, %c0_81] : memref<1x4x8x8xf32, #tpu.memory_space<vmem>>, vector<1x4x1x8xf32>
    %59 = vector.shape_cast %58 : vector<1x4x1x8xf32> to vector<4x8xf32>
    %60 = vector.extract_strided_slice %57 {offsets = [0, 0], sizes = [4, 8], strides = [1, 1]} : vector<4x9xf32> to vector<4x8xf32>
    %c0_82 = arith.constant 0 : index
    %c16_83 = arith.constant 16 : index
    %61 = vector.load %arg11[%c0_82, %c16_83] : memref<40x64xf32, #tpu.memory_space<vmem>>, vector<4x8xf32>
    tpu.vector_store %arg11[%c0_82, %c16_83], %60 {strides = array<i32>} : memref<40x64xf32, #tpu.memory_space<vmem>>, vector<4x8xf32>,
    %c4_84 = arith.constant 4 : index
    %c16_85 = arith.constant 16 : index
    %62 = vector.load %arg11[%c4_84, %c16_85] : memref<40x64xf32, #tpu.memory_space<vmem>>, vector<4x8xf32>
    tpu.vector_store %arg11[%c4_84, %c16_85], %59 {strides = array<i32>} : memref<40x64xf32, #tpu.memory_space<vmem>>, vector<4x8xf32>,
    %63 = vector.extract_strided_slice %57 {offsets = [0, 1], sizes = [4, 8], strides = [1, 1]} : vector<4x9xf32> to vector<4x8xf32>
    %c8_86 = arith.constant 8 : index
    %c16_87 = arith.constant 16 : index
    %64 = vector.load %arg11[%c8_86, %c16_87] : memref<40x64xf32, #tpu.memory_space<vmem>>, vector<4x8xf32>
    tpu.vector_store %arg11[%c8_86, %c16_87], %63 {strides = array<i32>} : memref<40x64xf32, #tpu.memory_space<vmem>>, vector<4x8xf32>,
    %c0_88 = arith.constant 0 : index
    %c0_89 = arith.constant 0 : index
    %c2_90 = arith.constant 2 : index
    %c0_91 = arith.constant 0 : index
    %65 = vector.load %arg4[%c0_88, %c0_89, %c2_90, %c0_91] : memref<1x4x8x9xf32, #tpu.memory_space<vmem>>, vector<1x4x1x9xf32>
    %66 = vector.shape_cast %65 : vector<1x4x1x9xf32> to vector<4x9xf32>
    %c0_92 = arith.constant 0 : index
    %c0_93 = arith.constant 0 : index
    %c2_94 = arith.constant 2 : index
    %c0_95 = arith.constant 0 : index
    %67 = vector.load %arg5[%c0_92, %c0_93, %c2_94, %c0_95] : memref<1x4x8x8xf32, #tpu.memory_space<vmem>>, vector<1x4x1x8xf32>
    %68 = vector.shape_cast %67 : vector<1x4x1x8xf32> to vector<4x8xf32>
    %69 = vector.extract_strided_slice %66 {offsets = [0, 0], sizes = [4, 8], strides = [1, 1]} : vector<4x9xf32> to vector<4x8xf32>
    %c12_96 = arith.constant 12 : index
    %c16_97 = arith.constant 16 : index
    %70 = vector.load %arg11[%c12_96, %c16_97] : memref<40x64xf32, #tpu.memory_space<vmem>>, vector<4x8xf32>
    tpu.vector_store %arg11[%c12_96, %c16_97], %69 {strides = array<i32>} : memref<40x64xf32, #tpu.memory_space<vmem>>, vector<4x8xf32>,
    %c16_98 = arith.constant 16 : index
    %c16_99 = arith.constant 16 : index
    %71 = vector.load %arg11[%c16_98, %c16_99] : memref<40x64xf32, #tpu.memory_space<vmem>>, vector<4x8xf32>
    tpu.vector_store %arg11[%c16_98, %c16_99], %68 {strides = array<i32>} : memref<40x64xf32, #tpu.memory_space<vmem>>, vector<4x8xf32>,
    %72 = vector.extract_strided_slice %66 {offsets = [0, 1], sizes = [4, 8], strides = [1, 1]} : vector<4x9xf32> to vector<4x8xf32>
    %c20_100 = arith.constant 20 : index
    %c16_101 = arith.constant 16 : index
    %73 = vector.load %arg11[%c20_100, %c16_101] : memref<40x64xf32, #tpu.memory_space<vmem>>, vector<4x8xf32>
    tpu.vector_store %arg11[%c20_100, %c16_101], %72 {strides = array<i32>} : memref<40x64xf32, #tpu.memory_space<vmem>>, vector<4x8xf32>,
    %c0_102 = arith.constant 0 : index
    %c0_103 = arith.constant 0 : index
    %c2_104 = arith.constant 2 : index
    %c0_105 = arith.constant 0 : index
    %74 = vector.load %arg6[%c0_102, %c0_103, %c2_104, %c0_105] : memref<1x4x8x9xf32, #tpu.memory_space<vmem>>, vector<1x4x1x9xf32>
    %75 = vector.shape_cast %74 : vector<1x4x1x9xf32> to vector<4x9xf32>
    %c0_106 = arith.constant 0 : index
    %c0_107 = arith.constant 0 : index
    %c2_108 = arith.constant 2 : index
    %c0_109 = arith.constant 0 : index
    %76 = vector.load %arg7[%c0_106, %c0_107, %c2_108, %c0_109] : memref<1x4x8x8xf32, #tpu.memory_space<vmem>>, vector<1x4x1x8xf32>
    %77 = vector.shape_cast %76 : vector<1x4x1x8xf32> to vector<4x8xf32>
    %78 = vector.extract_strided_slice %75 {offsets = [0, 0], sizes = [4, 8], strides = [1, 1]} : vector<4x9xf32> to vector<4x8xf32>
    %c24_110 = arith.constant 24 : index
    %c16_111 = arith.constant 16 : index
    %79 = vector.load %arg11[%c24_110, %c16_111] : memref<40x64xf32, #tpu.memory_space<vmem>>, vector<4x8xf32>
    tpu.vector_store %arg11[%c24_110, %c16_111], %78 {strides = array<i32>} : memref<40x64xf32, #tpu.memory_space<vmem>>, vector<4x8xf32>,
    %c28_112 = arith.constant 28 : index
    %c16_113 = arith.constant 16 : index
    %80 = vector.load %arg11[%c28_112, %c16_113] : memref<40x64xf32, #tpu.memory_space<vmem>>, vector<4x8xf32>
    tpu.vector_store %arg11[%c28_112, %c16_113], %77 {strides = array<i32>} : memref<40x64xf32, #tpu.memory_space<vmem>>, vector<4x8xf32>,
    %81 = vector.extract_strided_slice %75 {offsets = [0, 1], sizes = [4, 8], strides = [1, 1]} : vector<4x9xf32> to vector<4x8xf32>
    %c32_114 = arith.constant 32 : index
    %c16_115 = arith.constant 16 : index
    %82 = vector.load %arg11[%c32_114, %c16_115] : memref<40x64xf32, #tpu.memory_space<vmem>>, vector<4x8xf32>
    tpu.vector_store %arg11[%c32_114, %c16_115], %81 {strides = array<i32>} : memref<40x64xf32, #tpu.memory_space<vmem>>, vector<4x8xf32>,
    %c0_116 = arith.constant 0 : index
    %c0_117 = arith.constant 0 : index
    %c3 = arith.constant 3 : index
    %c0_118 = arith.constant 0 : index
    %83 = vector.load %arg2[%c0_116, %c0_117, %c3, %c0_118] : memref<1x4x8x9xf32, #tpu.memory_space<vmem>>, vector<1x4x1x9xf32>
    %84 = vector.shape_cast %83 : vector<1x4x1x9xf32> to vector<4x9xf32>
    %c0_119 = arith.constant 0 : index
    %c0_120 = arith.constant 0 : index
    %c3_121 = arith.constant 3 : index
    %c0_122 = arith.constant 0 : index
    %85 = vector.load %arg3[%c0_119, %c0_120, %c3_121, %c0_122] : memref<1x4x8x8xf32, #tpu.memory_space<vmem>>, vector<1x4x1x8xf32>
    %86 = vector.shape_cast %85 : vector<1x4x1x8xf32> to vector<4x8xf32>
    %87 = vector.extract_strided_slice %84 {offsets = [0, 0], sizes = [4, 8], strides = [1, 1]} : vector<4x9xf32> to vector<4x8xf32>
    %c0_123 = arith.constant 0 : index
    %c24_124 = arith.constant 24 : index
    %88 = vector.load %arg11[%c0_123, %c24_124] : memref<40x64xf32, #tpu.memory_space<vmem>>, vector<4x8xf32>
    tpu.vector_store %arg11[%c0_123, %c24_124], %87 {strides = array<i32>} : memref<40x64xf32, #tpu.memory_space<vmem>>, vector<4x8xf32>,
    %c4_125 = arith.constant 4 : index
    %c24_126 = arith.constant 24 : index
    %89 = vector.load %arg11[%c4_125, %c24_126] : memref<40x64xf32, #tpu.memory_space<vmem>>, vector<4x8xf32>
    tpu.vector_store %arg11[%c4_125, %c24_126], %86 {strides = array<i32>} : memref<40x64xf32, #tpu.memory_space<vmem>>, vector<4x8xf32>,
    %90 = vector.extract_strided_slice %84 {offsets = [0, 1], sizes = [4, 8], strides = [1, 1]} : vector<4x9xf32> to vector<4x8xf32>
    %c8_127 = arith.constant 8 : index
    %c24_128 = arith.constant 24 : index
    %91 = vector.load %arg11[%c8_127, %c24_128] : memref<40x64xf32, #tpu.memory_space<vmem>>, vector<4x8xf32>
    tpu.vector_store %arg11[%c8_127, %c24_128], %90 {strides = array<i32>} : memref<40x64xf32, #tpu.memory_space<vmem>>, vector<4x8xf32>,
    %c0_129 = arith.constant 0 : index
    %c0_130 = arith.constant 0 : index
    %c3_131 = arith.constant 3 : index
    %c0_132 = arith.constant 0 : index
    %92 = vector.load %arg4[%c0_129, %c0_130, %c3_131, %c0_132] : memref<1x4x8x9xf32, #tpu.memory_space<vmem>>, vector<1x4x1x9xf32>
    %93 = vector.shape_cast %92 : vector<1x4x1x9xf32> to vector<4x9xf32>
    %c0_133 = arith.constant 0 : index
    %c0_134 = arith.constant 0 : index
    %c3_135 = arith.constant 3 : index
    %c0_136 = arith.constant 0 : index
    %94 = vector.load %arg5[%c0_133, %c0_134, %c3_135, %c0_136] : memref<1x4x8x8xf32, #tpu.memory_space<vmem>>, vector<1x4x1x8xf32>
    %95 = vector.shape_cast %94 : vector<1x4x1x8xf32> to vector<4x8xf32>
    %96 = vector.extract_strided_slice %93 {offsets = [0, 0], sizes = [4, 8], strides = [1, 1]} : vector<4x9xf32> to vector<4x8xf32>
    %c12_137 = arith.constant 12 : index
    %c24_138 = arith.constant 24 : index
    %97 = vector.load %arg11[%c12_137, %c24_138] : memref<40x64xf32, #tpu.memory_space<vmem>>, vector<4x8xf32>
    tpu.vector_store %arg11[%c12_137, %c24_138], %96 {strides = array<i32>} : memref<40x64xf32, #tpu.memory_space<vmem>>, vector<4x8xf32>,
    %c16_139 = arith.constant 16 : index
    %c24_140 = arith.constant 24 : index
    %98 = vector.load %arg11[%c16_139, %c24_140] : memref<40x64xf32, #tpu.memory_space<vmem>>, vector<4x8xf32>
    tpu.vector_store %arg11[%c16_139, %c24_140], %95 {strides = array<i32>} : memref<40x64xf32, #tpu.memory_space<vmem>>, vector<4x8xf32>,
    %99 = vector.extract_strided_slice %93 {offsets = [0, 1], sizes = [4, 8], strides = [1, 1]} : vector<4x9xf32> to vector<4x8xf32>
    %c20_141 = arith.constant 20 : index
    %c24_142 = arith.constant 24 : index
    %100 = vector.load %arg11[%c20_141, %c24_142] : memref<40x64xf32, #tpu.memory_space<vmem>>, vector<4x8xf32>
    tpu.vector_store %arg11[%c20_141, %c24_142], %99 {strides = array<i32>} : memref<40x64xf32, #tpu.memory_space<vmem>>, vector<4x8xf32>,
    %c0_143 = arith.constant 0 : index
    %c0_144 = arith.constant 0 : index
    %c3_145 = arith.constant 3 : index
    %c0_146 = arith.constant 0 : index
    %101 = vector.load %arg6[%c0_143, %c0_144, %c3_145, %c0_146] : memref<1x4x8x9xf32, #tpu.memory_space<vmem>>, vector<1x4x1x9xf32>
    %102 = vector.shape_cast %101 : vector<1x4x1x9xf32> to vector<4x9xf32>
    %c0_147 = arith.constant 0 : index
    %c0_148 = arith.constant 0 : index
    %c3_149 = arith.constant 3 : index
    %c0_150 = arith.constant 0 : index
    %103 = vector.load %arg7[%c0_147, %c0_148, %c3_149, %c0_150] : memref<1x4x8x8xf32, #tpu.memory_space<vmem>>, vector<1x4x1x8xf32>
    %104 = vector.shape_cast %103 : vector<1x4x1x8xf32> to vector<4x8xf32>
    %105 = vector.extract_strided_slice %102 {offsets = [0, 0], sizes = [4, 8], strides = [1, 1]} : vector<4x9xf32> to vector<4x8xf32>
    %c24_151 = arith.constant 24 : index
    %c24_152 = arith.constant 24 : index
    %106 = vector.load %arg11[%c24_151, %c24_152] : memref<40x64xf32, #tpu.memory_space<vmem>>, vector<4x8xf32>
    tpu.vector_store %arg11[%c24_151, %c24_152], %105 {strides = array<i32>} : memref<40x64xf32, #tpu.memory_space<vmem>>, vector<4x8xf32>,
    %c28_153 = arith.constant 28 : index
    %c24_154 = arith.constant 24 : index
    %107 = vector.load %arg11[%c28_153, %c24_154] : memref<40x64xf32, #tpu.memory_space<vmem>>, vector<4x8xf32>
    tpu.vector_store %arg11[%c28_153, %c24_154], %104 {strides = array<i32>} : memref<40x64xf32, #tpu.memory_space<vmem>>, vector<4x8xf32>,
    %108 = vector.extract_strided_slice %102 {offsets = [0, 1], sizes = [4, 8], strides = [1, 1]} : vector<4x9xf32> to vector<4x8xf32>
    %c32_155 = arith.constant 32 : index
    %c24_156 = arith.constant 24 : index
    %109 = vector.load %arg11[%c32_155, %c24_156] : memref<40x64xf32, #tpu.memory_space<vmem>>, vector<4x8xf32>
    tpu.vector_store %arg11[%c32_155, %c24_156], %108 {strides = array<i32>} : memref<40x64xf32, #tpu.memory_space<vmem>>, vector<4x8xf32>,
    %c0_157 = arith.constant 0 : index
    %c0_158 = arith.constant 0 : index
    %c4_159 = arith.constant 4 : index
    %c0_160 = arith.constant 0 : index
    %110 = vector.load %arg2[%c0_157, %c0_158, %c4_159, %c0_160] : memref<1x4x8x9xf32, #tpu.memory_space<vmem>>, vector<1x4x1x9xf32>
    %111 = vector.shape_cast %110 : vector<1x4x1x9xf32> to vector<4x9xf32>
    %c0_161 = arith.constant 0 : index
    %c0_162 = arith.constant 0 : index
    %c4_163 = arith.constant 4 : index
    %c0_164 = arith.constant 0 : index
    %112 = vector.load %arg3[%c0_161, %c0_162, %c4_163, %c0_164] : memref<1x4x8x8xf32, #tpu.memory_space<vmem>>, vector<1x4x1x8xf32>
    %113 = vector.shape_cast %112 : vector<1x4x1x8xf32> to vector<4x8xf32>
    %114 = vector.extract_strided_slice %111 {offsets = [0, 0], sizes = [4, 8], strides = [1, 1]} : vector<4x9xf32> to vector<4x8xf32>
    %c0_165 = arith.constant 0 : index
    %c32_166 = arith.constant 32 : index
    %115 = vector.load %arg11[%c0_165, %c32_166] : memref<40x64xf32, #tpu.memory_space<vmem>>, vector<4x8xf32>
    tpu.vector_store %arg11[%c0_165, %c32_166], %114 {strides = array<i32>} : memref<40x64xf32, #tpu.memory_space<vmem>>, vector<4x8xf32>,
    %c4_167 = arith.constant 4 : index
    %c32_168 = arith.constant 32 : index
    %116 = vector.load %arg11[%c4_167, %c32_168] : memref<40x64xf32, #tpu.memory_space<vmem>>, vector<4x8xf32>
    tpu.vector_store %arg11[%c4_167, %c32_168], %113 {strides = array<i32>} : memref<40x64xf32, #tpu.memory_space<vmem>>, vector<4x8xf32>,
    %117 = vector.extract_strided_slice %111 {offsets = [0, 1], sizes = [4, 8], strides = [1, 1]} : vector<4x9xf32> to vector<4x8xf32>
    %c8_169 = arith.constant 8 : index
    %c32_170 = arith.constant 32 : index
    %118 = vector.load %arg11[%c8_169, %c32_170] : memref<40x64xf32, #tpu.memory_space<vmem>>, vector<4x8xf32>
    tpu.vector_store %arg11[%c8_169, %c32_170], %117 {strides = array<i32>} : memref<40x64xf32, #tpu.memory_space<vmem>>, vector<4x8xf32>,
    %c0_171 = arith.constant 0 : index
    %c0_172 = arith.constant 0 : index
    %c4_173 = arith.constant 4 : index
    %c0_174 = arith.constant 0 : index
    %119 = vector.load %arg4[%c0_171, %c0_172, %c4_173, %c0_174] : memref<1x4x8x9xf32, #tpu.memory_space<vmem>>, vector<1x4x1x9xf32>
    %120 = vector.shape_cast %119 : vector<1x4x1x9xf32> to vector<4x9xf32>
    %c0_175 = arith.constant 0 : index
    %c0_176 = arith.constant 0 : index
    %c4_177 = arith.constant 4 : index
    %c0_178 = arith.constant 0 : index
    %121 = vector.load %arg5[%c0_175, %c0_176, %c4_177, %c0_178] : memref<1x4x8x8xf32, #tpu.memory_space<vmem>>, vector<1x4x1x8xf32>
    %122 = vector.shape_cast %121 : vector<1x4x1x8xf32> to vector<4x8xf32>
    %123 = vector.extract_strided_slice %120 {offsets = [0, 0], sizes = [4, 8], strides = [1, 1]} : vector<4x9xf32> to vector<4x8xf32>
    %c12_179 = arith.constant 12 : index
    %c32_180 = arith.constant 32 : index
    %124 = vector.load %arg11[%c12_179, %c32_180] : memref<40x64xf32, #tpu.memory_space<vmem>>, vector<4x8xf32>
    tpu.vector_store %arg11[%c12_179, %c32_180], %123 {strides = array<i32>} : memref<40x64xf32, #tpu.memory_space<vmem>>, vector<4x8xf32>,
    %c16_181 = arith.constant 16 : index
    %c32_182 = arith.constant 32 : index
    %125 = vector.load %arg11[%c16_181, %c32_182] : memref<40x64xf32, #tpu.memory_space<vmem>>, vector<4x8xf32>
    tpu.vector_store %arg11[%c16_181, %c32_182], %122 {strides = array<i32>} : memref<40x64xf32, #tpu.memory_space<vmem>>, vector<4x8xf32>,
    %126 = vector.extract_strided_slice %120 {offsets = [0, 1], sizes = [4, 8], strides = [1, 1]} : vector<4x9xf32> to vector<4x8xf32>
    %c20_183 = arith.constant 20 : index
    %c32_184 = arith.constant 32 : index
    %127 = vector.load %arg11[%c20_183, %c32_184] : memref<40x64xf32, #tpu.memory_space<vmem>>, vector<4x8xf32>
    tpu.vector_store %arg11[%c20_183, %c32_184], %126 {strides = array<i32>} : memref<40x64xf32, #tpu.memory_space<vmem>>, vector<4x8xf32>,
    %c0_185 = arith.constant 0 : index
    %c0_186 = arith.constant 0 : index
    %c4_187 = arith.constant 4 : index
    %c0_188 = arith.constant 0 : index
    %128 = vector.load %arg6[%c0_185, %c0_186, %c4_187, %c0_188] : memref<1x4x8x9xf32, #tpu.memory_space<vmem>>, vector<1x4x1x9xf32>
    %129 = vector.shape_cast %128 : vector<1x4x1x9xf32> to vector<4x9xf32>
    %c0_189 = arith.constant 0 : index
    %c0_190 = arith.constant 0 : index
    %c4_191 = arith.constant 4 : index
    %c0_192 = arith.constant 0 : index
    %130 = vector.load %arg7[%c0_189, %c0_190, %c4_191, %c0_192] : memref<1x4x8x8xf32, #tpu.memory_space<vmem>>, vector<1x4x1x8xf32>
    %131 = vector.shape_cast %130 : vector<1x4x1x8xf32> to vector<4x8xf32>
    %132 = vector.extract_strided_slice %129 {offsets = [0, 0], sizes = [4, 8], strides = [1, 1]} : vector<4x9xf32> to vector<4x8xf32>
    %c24_193 = arith.constant 24 : index
    %c32_194 = arith.constant 32 : index
    %133 = vector.load %arg11[%c24_193, %c32_194] : memref<40x64xf32, #tpu.memory_space<vmem>>, vector<4x8xf32>
    tpu.vector_store %arg11[%c24_193, %c32_194], %132 {strides = array<i32>} : memref<40x64xf32, #tpu.memory_space<vmem>>, vector<4x8xf32>,
    %c28_195 = arith.constant 28 : index
    %c32_196 = arith.constant 32 : index
    %134 = vector.load %arg11[%c28_195, %c32_196] : memref<40x64xf32, #tpu.memory_space<vmem>>, vector<4x8xf32>
    tpu.vector_store %arg11[%c28_195, %c32_196], %131 {strides = array<i32>} : memref<40x64xf32, #tpu.memory_space<vmem>>, vector<4x8xf32>,
    %135 = vector.extract_strided_slice %129 {offsets = [0, 1], sizes = [4, 8], strides = [1, 1]} : vector<4x9xf32> to vector<4x8xf32>
    %c32_197 = arith.constant 32 : index
    %c32_198 = arith.constant 32 : index
    %136 = vector.load %arg11[%c32_197, %c32_198] : memref<40x64xf32, #tpu.memory_space<vmem>>, vector<4x8xf32>
    tpu.vector_store %arg11[%c32_197, %c32_198], %135 {strides = array<i32>} : memref<40x64xf32, #tpu.memory_space<vmem>>, vector<4x8xf32>,
    %c0_199 = arith.constant 0 : index
    %c0_200 = arith.constant 0 : index
    %c5 = arith.constant 5 : index
    %c0_201 = arith.constant 0 : index
    %137 = vector.load %arg2[%c0_199, %c0_200, %c5, %c0_201] : memref<1x4x8x9xf32, #tpu.memory_space<vmem>>, vector<1x4x1x9xf32>
    %138 = vector.shape_cast %137 : vector<1x4x1x9xf32> to vector<4x9xf32>
    %c0_202 = arith.constant 0 : index
    %c0_203 = arith.constant 0 : index
    %c5_204 = arith.constant 5 : index
    %c0_205 = arith.constant 0 : index
    %139 = vector.load %arg3[%c0_202, %c0_203, %c5_204, %c0_205] : memref<1x4x8x8xf32, #tpu.memory_space<vmem>>, vector<1x4x1x8xf32>
    %140 = vector.shape_cast %139 : vector<1x4x1x8xf32> to vector<4x8xf32>
    %141 = vector.extract_strided_slice %138 {offsets = [0, 0], sizes = [4, 8], strides = [1, 1]} : vector<4x9xf32> to vector<4x8xf32>
    %c0_206 = arith.constant 0 : index
    %c40 = arith.constant 40 : index
    %142 = vector.load %arg11[%c0_206, %c40] : memref<40x64xf32, #tpu.memory_space<vmem>>, vector<4x8xf32>
    tpu.vector_store %arg11[%c0_206, %c40], %141 {strides = array<i32>} : memref<40x64xf32, #tpu.memory_space<vmem>>, vector<4x8xf32>,
    %c4_207 = arith.constant 4 : index
    %c40_208 = arith.constant 40 : index
    %143 = vector.load %arg11[%c4_207, %c40_208] : memref<40x64xf32, #tpu.memory_space<vmem>>, vector<4x8xf32>
    tpu.vector_store %arg11[%c4_207, %c40_208], %140 {strides = array<i32>} : memref<40x64xf32, #tpu.memory_space<vmem>>, vector<4x8xf32>,
    %144 = vector.extract_strided_slice %138 {offsets = [0, 1], sizes = [4, 8], strides = [1, 1]} : vector<4x9xf32> to vector<4x8xf32>
    %c8_209 = arith.constant 8 : index
    %c40_210 = arith.constant 40 : index
    %145 = vector.load %arg11[%c8_209, %c40_210] : memref<40x64xf32, #tpu.memory_space<vmem>>, vector<4x8xf32>
    tpu.vector_store %arg11[%c8_209, %c40_210], %144 {strides = array<i32>} : memref<40x64xf32, #tpu.memory_space<vmem>>, vector<4x8xf32>,
    %c0_211 = arith.constant 0 : index
    %c0_212 = arith.constant 0 : index
    %c5_213 = arith.constant 5 : index
    %c0_214 = arith.constant 0 : index
    %146 = vector.load %arg4[%c0_211, %c0_212, %c5_213, %c0_214] : memref<1x4x8x9xf32, #tpu.memory_space<vmem>>, vector<1x4x1x9xf32>
    %147 = vector.shape_cast %146 : vector<1x4x1x9xf32> to vector<4x9xf32>
    %c0_215 = arith.constant 0 : index
    %c0_216 = arith.constant 0 : index
    %c5_217 = arith.constant 5 : index
    %c0_218 = arith.constant 0 : index
    %148 = vector.load %arg5[%c0_215, %c0_216, %c5_217, %c0_218] : memref<1x4x8x8xf32, #tpu.memory_space<vmem>>, vector<1x4x1x8xf32>
    %149 = vector.shape_cast %148 : vector<1x4x1x8xf32> to vector<4x8xf32>
    %150 = vector.extract_strided_slice %147 {offsets = [0, 0], sizes = [4, 8], strides = [1, 1]} : vector<4x9xf32> to vector<4x8xf32>
    %c12_219 = arith.constant 12 : index
    %c40_220 = arith.constant 40 : index
    %151 = vector.load %arg11[%c12_219, %c40_220] : memref<40x64xf32, #tpu.memory_space<vmem>>, vector<4x8xf32>
    tpu.vector_store %arg11[%c12_219, %c40_220], %150 {strides = array<i32>} : memref<40x64xf32, #tpu.memory_space<vmem>>, vector<4x8xf32>,
    %c16_221 = arith.constant 16 : index
    %c40_222 = arith.constant 40 : index
    %152 = vector.load %arg11[%c16_221, %c40_222] : memref<40x64xf32, #tpu.memory_space<vmem>>, vector<4x8xf32>
    tpu.vector_store %arg11[%c16_221, %c40_222], %149 {strides = array<i32>} : memref<40x64xf32, #tpu.memory_space<vmem>>, vector<4x8xf32>,
    %153 = vector.extract_strided_slice %147 {offsets = [0, 1], sizes = [4, 8], strides = [1, 1]} : vector<4x9xf32> to vector<4x8xf32>
    %c20_223 = arith.constant 20 : index
    %c40_224 = arith.constant 40 : index
    %154 = vector.load %arg11[%c20_223, %c40_224] : memref<40x64xf32, #tpu.memory_space<vmem>>, vector<4x8xf32>
    tpu.vector_store %arg11[%c20_223, %c40_224], %153 {strides = array<i32>} : memref<40x64xf32, #tpu.memory_space<vmem>>, vector<4x8xf32>,
    %c0_225 = arith.constant 0 : index
    %c0_226 = arith.constant 0 : index
    %c5_227 = arith.constant 5 : index
    %c0_228 = arith.constant 0 : index
    %155 = vector.load %arg6[%c0_225, %c0_226, %c5_227, %c0_228] : memref<1x4x8x9xf32, #tpu.memory_space<vmem>>, vector<1x4x1x9xf32>
    %156 = vector.shape_cast %155 : vector<1x4x1x9xf32> to vector<4x9xf32>
    %c0_229 = arith.constant 0 : index
    %c0_230 = arith.constant 0 : index
    %c5_231 = arith.constant 5 : index
    %c0_232 = arith.constant 0 : index
    %157 = vector.load %arg7[%c0_229, %c0_230, %c5_231, %c0_232] : memref<1x4x8x8xf32, #tpu.memory_space<vmem>>, vector<1x4x1x8xf32>
    %158 = vector.shape_cast %157 : vector<1x4x1x8xf32> to vector<4x8xf32>
    %159 = vector.extract_strided_slice %156 {offsets = [0, 0], sizes = [4, 8], strides = [1, 1]} : vector<4x9xf32> to vector<4x8xf32>
    %c24_233 = arith.constant 24 : index
    %c40_234 = arith.constant 40 : index
    %160 = vector.load %arg11[%c24_233, %c40_234] : memref<40x64xf32, #tpu.memory_space<vmem>>, vector<4x8xf32>
    tpu.vector_store %arg11[%c24_233, %c40_234], %159 {strides = array<i32>} : memref<40x64xf32, #tpu.memory_space<vmem>>, vector<4x8xf32>,
    %c28_235 = arith.constant 28 : index
    %c40_236 = arith.constant 40 : index
    %161 = vector.load %arg11[%c28_235, %c40_236] : memref<40x64xf32, #tpu.memory_space<vmem>>, vector<4x8xf32>
    tpu.vector_store %arg11[%c28_235, %c40_236], %158 {strides = array<i32>} : memref<40x64xf32, #tpu.memory_space<vmem>>, vector<4x8xf32>,
    %162 = vector.extract_strided_slice %156 {offsets = [0, 1], sizes = [4, 8], strides = [1, 1]} : vector<4x9xf32> to vector<4x8xf32>
    %c32_237 = arith.constant 32 : index
    %c40_238 = arith.constant 40 : index
    %163 = vector.load %arg11[%c32_237, %c40_238] : memref<40x64xf32, #tpu.memory_space<vmem>>, vector<4x8xf32>
    tpu.vector_store %arg11[%c32_237, %c40_238], %162 {strides = array<i32>} : memref<40x64xf32, #tpu.memory_space<vmem>>, vector<4x8xf32>,
    %c0_239 = arith.constant 0 : index
    %c0_240 = arith.constant 0 : index
    %c6 = arith.constant 6 : index
    %c0_241 = arith.constant 0 : index
    %164 = vector.load %arg2[%c0_239, %c0_240, %c6, %c0_241] : memref<1x4x8x9xf32, #tpu.memory_space<vmem>>, vector<1x4x1x9xf32>
    %165 = vector.shape_cast %164 : vector<1x4x1x9xf32> to vector<4x9xf32>
    %c0_242 = arith.constant 0 : index
    %c0_243 = arith.constant 0 : index
    %c6_244 = arith.constant 6 : index
    %c0_245 = arith.constant 0 : index
    %166 = vector.load %arg3[%c0_242, %c0_243, %c6_244, %c0_245] : memref<1x4x8x8xf32, #tpu.memory_space<vmem>>, vector<1x4x1x8xf32>
    %167 = vector.shape_cast %166 : vector<1x4x1x8xf32> to vector<4x8xf32>
    %168 = vector.extract_strided_slice %165 {offsets = [0, 0], sizes = [4, 8], strides = [1, 1]} : vector<4x9xf32> to vector<4x8xf32>
    %c0_246 = arith.constant 0 : index
    %c48 = arith.constant 48 : index
    %169 = vector.load %arg11[%c0_246, %c48] : memref<40x64xf32, #tpu.memory_space<vmem>>, vector<4x8xf32>
    tpu.vector_store %arg11[%c0_246, %c48], %168 {strides = array<i32>} : memref<40x64xf32, #tpu.memory_space<vmem>>, vector<4x8xf32>,
    %c4_247 = arith.constant 4 : index
    %c48_248 = arith.constant 48 : index
    %170 = vector.load %arg11[%c4_247, %c48_248] : memref<40x64xf32, #tpu.memory_space<vmem>>, vector<4x8xf32>
    tpu.vector_store %arg11[%c4_247, %c48_248], %167 {strides = array<i32>} : memref<40x64xf32, #tpu.memory_space<vmem>>, vector<4x8xf32>,
    %171 = vector.extract_strided_slice %165 {offsets = [0, 1], sizes = [4, 8], strides = [1, 1]} : vector<4x9xf32> to vector<4x8xf32>
    %c8_249 = arith.constant 8 : index
    %c48_250 = arith.constant 48 : index
    %172 = vector.load %arg11[%c8_249, %c48_250] : memref<40x64xf32, #tpu.memory_space<vmem>>, vector<4x8xf32>
    tpu.vector_store %arg11[%c8_249, %c48_250], %171 {strides = array<i32>} : memref<40x64xf32, #tpu.memory_space<vmem>>, vector<4x8xf32>,
    %c0_251 = arith.constant 0 : index
    %c0_252 = arith.constant 0 : index
    %c6_253 = arith.constant 6 : index
    %c0_254 = arith.constant 0 : index
    %173 = vector.load %arg4[%c0_251, %c0_252, %c6_253, %c0_254] : memref<1x4x8x9xf32, #tpu.memory_space<vmem>>, vector<1x4x1x9xf32>
    %174 = vector.shape_cast %173 : vector<1x4x1x9xf32> to vector<4x9xf32>
    %c0_255 = arith.constant 0 : index
    %c0_256 = arith.constant 0 : index
    %c6_257 = arith.constant 6 : index
    %c0_258 = arith.constant 0 : index
    %175 = vector.load %arg5[%c0_255, %c0_256, %c6_257, %c0_258] : memref<1x4x8x8xf32, #tpu.memory_space<vmem>>, vector<1x4x1x8xf32>
    %176 = vector.shape_cast %175 : vector<1x4x1x8xf32> to vector<4x8xf32>
    %177 = vector.extract_strided_slice %174 {offsets = [0, 0], sizes = [4, 8], strides = [1, 1]} : vector<4x9xf32> to vector<4x8xf32>
    %c12_259 = arith.constant 12 : index
    %c48_260 = arith.constant 48 : index
    %178 = vector.load %arg11[%c12_259, %c48_260] : memref<40x64xf32, #tpu.memory_space<vmem>>, vector<4x8xf32>
    tpu.vector_store %arg11[%c12_259, %c48_260], %177 {strides = array<i32>} : memref<40x64xf32, #tpu.memory_space<vmem>>, vector<4x8xf32>,
    %c16_261 = arith.constant 16 : index
    %c48_262 = arith.constant 48 : index
    %179 = vector.load %arg11[%c16_261, %c48_262] : memref<40x64xf32, #tpu.memory_space<vmem>>, vector<4x8xf32>
    tpu.vector_store %arg11[%c16_261, %c48_262], %176 {strides = array<i32>} : memref<40x64xf32, #tpu.memory_space<vmem>>, vector<4x8xf32>,
    %180 = vector.extract_strided_slice %174 {offsets = [0, 1], sizes = [4, 8], strides = [1, 1]} : vector<4x9xf32> to vector<4x8xf32>
    %c20_263 = arith.constant 20 : index
    %c48_264 = arith.constant 48 : index
    %181 = vector.load %arg11[%c20_263, %c48_264] : memref<40x64xf32, #tpu.memory_space<vmem>>, vector<4x8xf32>
    tpu.vector_store %arg11[%c20_263, %c48_264], %180 {strides = array<i32>} : memref<40x64xf32, #tpu.memory_space<vmem>>, vector<4x8xf32>,
    %c0_265 = arith.constant 0 : index
    %c0_266 = arith.constant 0 : index
    %c6_267 = arith.constant 6 : index
    %c0_268 = arith.constant 0 : index
    %182 = vector.load %arg6[%c0_265, %c0_266, %c6_267, %c0_268] : memref<1x4x8x9xf32, #tpu.memory_space<vmem>>, vector<1x4x1x9xf32>
    %183 = vector.shape_cast %182 : vector<1x4x1x9xf32> to vector<4x9xf32>
    %c0_269 = arith.constant 0 : index
    %c0_270 = arith.constant 0 : index
    %c6_271 = arith.constant 6 : index
    %c0_272 = arith.constant 0 : index
    %184 = vector.load %arg7[%c0_269, %c0_270, %c6_271, %c0_272] : memref<1x4x8x8xf32, #tpu.memory_space<vmem>>, vector<1x4x1x8xf32>
    %185 = vector.shape_cast %184 : vector<1x4x1x8xf32> to vector<4x8xf32>
    %186 = vector.extract_strided_slice %183 {offsets = [0, 0], sizes = [4, 8], strides = [1, 1]} : vector<4x9xf32> to vector<4x8xf32>
    %c24_273 = arith.constant 24 : index
    %c48_274 = arith.constant 48 : index
    %187 = vector.load %arg11[%c24_273, %c48_274] : memref<40x64xf32, #tpu.memory_space<vmem>>, vector<4x8xf32>
    tpu.vector_store %arg11[%c24_273, %c48_274], %186 {strides = array<i32>} : memref<40x64xf32, #tpu.memory_space<vmem>>, vector<4x8xf32>,
    %c28_275 = arith.constant 28 : index
    %c48_276 = arith.constant 48 : index
    %188 = vector.load %arg11[%c28_275, %c48_276] : memref<40x64xf32, #tpu.memory_space<vmem>>, vector<4x8xf32>
    tpu.vector_store %arg11[%c28_275, %c48_276], %185 {strides = array<i32>} : memref<40x64xf32, #tpu.memory_space<vmem>>, vector<4x8xf32>,
    %189 = vector.extract_strided_slice %183 {offsets = [0, 1], sizes = [4, 8], strides = [1, 1]} : vector<4x9xf32> to vector<4x8xf32>
    %c32_277 = arith.constant 32 : index
    %c48_278 = arith.constant 48 : index
    %190 = vector.load %arg11[%c32_277, %c48_278] : memref<40x64xf32, #tpu.memory_space<vmem>>, vector<4x8xf32>
    tpu.vector_store %arg11[%c32_277, %c48_278], %189 {strides = array<i32>} : memref<40x64xf32, #tpu.memory_space<vmem>>, vector<4x8xf32>,
    %c0_279 = arith.constant 0 : index
    %c0_280 = arith.constant 0 : index
    %c7 = arith.constant 7 : index
    %c0_281 = arith.constant 0 : index
    %191 = vector.load %arg2[%c0_279, %c0_280, %c7, %c0_281] : memref<1x4x8x9xf32, #tpu.memory_space<vmem>>, vector<1x4x1x9xf32>
    %192 = vector.shape_cast %191 : vector<1x4x1x9xf32> to vector<4x9xf32>
    %c0_282 = arith.constant 0 : index
    %c0_283 = arith.constant 0 : index
    %c7_284 = arith.constant 7 : index
    %c0_285 = arith.constant 0 : index
    %193 = vector.load %arg3[%c0_282, %c0_283, %c7_284, %c0_285] : memref<1x4x8x8xf32, #tpu.memory_space<vmem>>, vector<1x4x1x8xf32>
    %194 = vector.shape_cast %193 : vector<1x4x1x8xf32> to vector<4x8xf32>
    %195 = vector.extract_strided_slice %192 {offsets = [0, 0], sizes = [4, 8], strides = [1, 1]} : vector<4x9xf32> to vector<4x8xf32>
    %c0_286 = arith.constant 0 : index
    %c56 = arith.constant 56 : index
    %196 = vector.load %arg11[%c0_286, %c56] : memref<40x64xf32, #tpu.memory_space<vmem>>, vector<4x8xf32>
    tpu.vector_store %arg11[%c0_286, %c56], %195 {strides = array<i32>} : memref<40x64xf32, #tpu.memory_space<vmem>>, vector<4x8xf32>,
    %c4_287 = arith.constant 4 : index
    %c56_288 = arith.constant 56 : index
    %197 = vector.load %arg11[%c4_287, %c56_288] : memref<40x64xf32, #tpu.memory_space<vmem>>, vector<4x8xf32>
    tpu.vector_store %arg11[%c4_287, %c56_288], %194 {strides = array<i32>} : memref<40x64xf32, #tpu.memory_space<vmem>>, vector<4x8xf32>,
    %198 = vector.extract_strided_slice %192 {offsets = [0, 1], sizes = [4, 8], strides = [1, 1]} : vector<4x9xf32> to vector<4x8xf32>
    %c8_289 = arith.constant 8 : index
    %c56_290 = arith.constant 56 : index
    %199 = vector.load %arg11[%c8_289, %c56_290] : memref<40x64xf32, #tpu.memory_space<vmem>>, vector<4x8xf32>
    tpu.vector_store %arg11[%c8_289, %c56_290], %198 {strides = array<i32>} : memref<40x64xf32, #tpu.memory_space<vmem>>, vector<4x8xf32>,
    %c0_291 = arith.constant 0 : index
    %c0_292 = arith.constant 0 : index
    %c7_293 = arith.constant 7 : index
    %c0_294 = arith.constant 0 : index
    %200 = vector.load %arg4[%c0_291, %c0_292, %c7_293, %c0_294] : memref<1x4x8x9xf32, #tpu.memory_space<vmem>>, vector<1x4x1x9xf32>
    %201 = vector.shape_cast %200 : vector<1x4x1x9xf32> to vector<4x9xf32>
    %c0_295 = arith.constant 0 : index
    %c0_296 = arith.constant 0 : index
    %c7_297 = arith.constant 7 : index
    %c0_298 = arith.constant 0 : index
    %202 = vector.load %arg5[%c0_295, %c0_296, %c7_297, %c0_298] : memref<1x4x8x8xf32, #tpu.memory_space<vmem>>, vector<1x4x1x8xf32>
    %203 = vector.shape_cast %202 : vector<1x4x1x8xf32> to vector<4x8xf32>
    %204 = vector.extract_strided_slice %201 {offsets = [0, 0], sizes = [4, 8], strides = [1, 1]} : vector<4x9xf32> to vector<4x8xf32>
    %c12_299 = arith.constant 12 : index
    %c56_300 = arith.constant 56 : index
    %205 = vector.load %arg11[%c12_299, %c56_300] : memref<40x64xf32, #tpu.memory_space<vmem>>, vector<4x8xf32>
    tpu.vector_store %arg11[%c12_299, %c56_300], %204 {strides = array<i32>} : memref<40x64xf32, #tpu.memory_space<vmem>>, vector<4x8xf32>,
    %c16_301 = arith.constant 16 : index
    %c56_302 = arith.constant 56 : index
    %206 = vector.load %arg11[%c16_301, %c56_302] : memref<40x64xf32, #tpu.memory_space<vmem>>, vector<4x8xf32>
    tpu.vector_store %arg11[%c16_301, %c56_302], %203 {strides = array<i32>} : memref<40x64xf32, #tpu.memory_space<vmem>>, vector<4x8xf32>,
    %207 = vector.extract_strided_slice %201 {offsets = [0, 1], sizes = [4, 8], strides = [1, 1]} : vector<4x9xf32> to vector<4x8xf32>
    %c20_303 = arith.constant 20 : index
    %c56_304 = arith.constant 56 : index
    %208 = vector.load %arg11[%c20_303, %c56_304] : memref<40x64xf32, #tpu.memory_space<vmem>>, vector<4x8xf32>
    tpu.vector_store %arg11[%c20_303, %c56_304], %207 {strides = array<i32>} : memref<40x64xf32, #tpu.memory_space<vmem>>, vector<4x8xf32>,
    %c0_305 = arith.constant 0 : index
    %c0_306 = arith.constant 0 : index
    %c7_307 = arith.constant 7 : index
    %c0_308 = arith.constant 0 : index
    %209 = vector.load %arg6[%c0_305, %c0_306, %c7_307, %c0_308] : memref<1x4x8x9xf32, #tpu.memory_space<vmem>>, vector<1x4x1x9xf32>
    %210 = vector.shape_cast %209 : vector<1x4x1x9xf32> to vector<4x9xf32>
    %c0_309 = arith.constant 0 : index
    %c0_310 = arith.constant 0 : index
    %c7_311 = arith.constant 7 : index
    %c0_312 = arith.constant 0 : index
    %211 = vector.load %arg7[%c0_309, %c0_310, %c7_311, %c0_312] : memref<1x4x8x8xf32, #tpu.memory_space<vmem>>, vector<1x4x1x8xf32>
    %212 = vector.shape_cast %211 : vector<1x4x1x8xf32> to vector<4x8xf32>
    %213 = vector.extract_strided_slice %210 {offsets = [0, 0], sizes = [4, 8], strides = [1, 1]} : vector<4x9xf32> to vector<4x8xf32>
    %c24_313 = arith.constant 24 : index
    %c56_314 = arith.constant 56 : index
    %214 = vector.load %arg11[%c24_313, %c56_314] : memref<40x64xf32, #tpu.memory_space<vmem>>, vector<4x8xf32>
    tpu.vector_store %arg11[%c24_313, %c56_314], %213 {strides = array<i32>} : memref<40x64xf32, #tpu.memory_space<vmem>>, vector<4x8xf32>,
    %c28_315 = arith.constant 28 : index
    %c56_316 = arith.constant 56 : index
    %215 = vector.load %arg11[%c28_315, %c56_316] : memref<40x64xf32, #tpu.memory_space<vmem>>, vector<4x8xf32>
    tpu.vector_store %arg11[%c28_315, %c56_316], %212 {strides = array<i32>} : memref<40x64xf32, #tpu.memory_space<vmem>>, vector<4x8xf32>,
    %216 = vector.extract_strided_slice %210 {offsets = [0, 1], sizes = [4, 8], strides = [1, 1]} : vector<4x9xf32> to vector<4x8xf32>
    %c32_317 = arith.constant 32 : index
    %c56_318 = arith.constant 56 : index
    %217 = vector.load %arg11[%c32_317, %c56_318] : memref<40x64xf32, #tpu.memory_space<vmem>>, vector<4x8xf32>
    tpu.vector_store %arg11[%c32_317, %c56_318], %216 {strides = array<i32>} : memref<40x64xf32, #tpu.memory_space<vmem>>, vector<4x8xf32>,
    %c0_319 = arith.constant 0 : index
    %c0_320 = arith.constant 0 : index
    %218 = vector.load %arg8[%c0_319, %c0_320] : memref<8x40xf32, #tpu.memory_space<vmem>>, vector<8x40xf32>
    %c0_321 = arith.constant 0 : index
    %c0_322 = arith.constant 0 : index
    %219 = vector.load %arg11[%c0_321, %c0_322] : memref<40x64xf32, #tpu.memory_space<vmem>>, vector<40x64xf32>
    %cst_323 = arith.constant dense<0.000000e+00> : vector<8x64xf32>
    %220 = tpu.matmul %218, %219, %cst_323 {dimension_numbers = #tpu.dot_dimension_numbers<[1], [0], [0], [1], [0, 0, 1, 1], [], []>} : vector<8x40xf32>, vector<40x64xf32>, vector<8x64xf32> -> vector<8x64xf32>
    %c0_324 = arith.constant 0 : index
    %c0_325 = arith.constant 0 : index
    %221 = vector.load %arg9[%c0_324, %c0_325] : memref<8x1xf32, #tpu.memory_space<vmem>>, vector<8x1xf32>
    %222 = vector.broadcast %221 : vector<8x1xf32> to vector<8x64xf32>
    %223 = arith.addf %220, %222 : vector<8x64xf32>
    %cst_326 = arith.constant 0.000000e+00 : f32
    %224 = vector.broadcast %cst_326 : f32 to vector<8x64xf32>
    %225 = arith.maximumf %223, %224 : vector<8x64xf32>
    %c0_327 = arith.constant 0 : index
    %c0_328 = arith.constant 0 : index
    %c0_329 = arith.constant 0 : index
    %226 = vector.load %arg10[%c0_327, %c0_328, %c0_329] : memref<1x8x64xf32, #tpu.memory_space<vmem>>, vector<1x8x64xf32>
    %227 = vector.shape_cast %226 : vector<1x8x64xf32> to vector<8x64xf32>
    %228 = vector.shape_cast %225 : vector<8x64xf32> to vector<1x8x64xf32>
    tpu.vector_store %arg10[%c0_327, %c0_328, %c0_329], %228 {strides = array<i32>} : memref<1x8x64xf32, #tpu.memory_space<vmem>>, vector<1x8x64xf32>,
    return
  }
  func.func @transform_0(%arg0: i32, %arg1: i32) -> (i32, i32, i32, i32) {
    %c0_i32 = arith.constant 0 : i32
    %c0_i32_0 = arith.constant 0 : i32
    %c0_i32_1 = arith.constant 0 : i32
    return %arg0, %c0_i32, %arg1, %c0_i32_0 : i32, i32, i32, i32
  }
  func.func @transform_1(%arg0: i32, %arg1: i32) -> (i32, i32, i32, i32) {
    %c0_i32 = arith.constant 0 : i32
    %c0_i32_0 = arith.constant 0 : i32
    %c0_i32_1 = arith.constant 0 : i32
    return %arg0, %c0_i32, %arg1, %c0_i32_0 : i32, i32, i32, i32
  }
  func.func @transform_2(%arg0: i32, %arg1: i32) -> (i32, i32, i32, i32) {
    %c0_i32 = arith.constant 0 : i32
    %c0_i32_0 = arith.constant 0 : i32
    %c0_i32_1 = arith.constant 0 : i32
    return %arg0, %c0_i32, %arg1, %c0_i32_0 : i32, i32, i32, i32
  }
  func.func @transform_3(%arg0: i32, %arg1: i32) -> (i32, i32, i32, i32) {
    %c0_i32 = arith.constant 0 : i32
    %c0_i32_0 = arith.constant 0 : i32
    %c0_i32_1 = arith.constant 0 : i32
    return %arg0, %c0_i32, %arg1, %c0_i32_0 : i32, i32, i32, i32
  }
  func.func @transform_4(%arg0: i32, %arg1: i32) -> (i32, i32, i32, i32) {
    %c0_i32 = arith.constant 0 : i32
    %c0_i32_0 = arith.constant 0 : i32
    %c0_i32_1 = arith.constant 0 : i32
    return %arg0, %c0_i32, %arg1, %c0_i32_0 : i32, i32, i32, i32
  }
  func.func @transform_5(%arg0: i32, %arg1: i32) -> (i32, i32, i32, i32) {
    %c0_i32 = arith.constant 0 : i32
    %c0_i32_0 = arith.constant 0 : i32
    %c0_i32_1 = arith.constant 0 : i32
    return %arg0, %c0_i32, %arg1, %c0_i32_0 : i32, i32, i32, i32
  }
  func.func @transform_6(%arg0: i32, %arg1: i32) -> (i32, i32) {
    %c0_i32 = arith.constant 0 : i32
    %c0_i32_0 = arith.constant 0 : i32
    %c0_i32_1 = arith.constant 0 : i32
    return %c0_i32, %c0_i32_0 : i32, i32
  }
  func.func @transform_7(%arg0: i32, %arg1: i32) -> (i32, i32) {
    %c0_i32 = arith.constant 0 : i32
    %c0_i32_0 = arith.constant 0 : i32
    %c0_i32_1 = arith.constant 0 : i32
    return %c0_i32, %c0_i32_0 : i32, i32
  }
  func.func @transform_8(%arg0: i32, %arg1: i32) -> (i32, i32, i32) {
    %c0_i32 = arith.constant 0 : i32
    %c0_i32_0 = arith.constant 0 : i32
    return %arg0, %c0_i32, %arg1 : i32, i32, i32
  }
}

</mosaic_0001>

<llo_original>
// kernel: _lambda_.1
$region0: #{_lambda_.1}
  #allocation0 [shape = 'u32[]', space=smem, size = 0x4, offset = 0x4, fixed_abs, tag = 'smem constant byte address 0x4 - core index']
  #allocation1 [shape = 'u32[72,128]{1,0:T(1,128)}', space=vmem, size = 0x9000, scoped, tag = 'internal scratch']
  #allocation2 [shape = 'f32[40,64]{1,0:T(8,128)}', space=vmem, size = 0x5000, scoped, tag = 'scratch operand']
  %s0 = inlined_call_operand.vmem [shape: f32[2,4,8,9], index: 0, kind: input, shape index: {}]
  %s1 = inlined_call_operand.vmem [shape: f32[2,4,8,8], index: 1, kind: input, shape index: {}]
  %s2 = inlined_call_operand.vmem [shape: f32[2,4,8,9], index: 2, kind: input, shape index: {}]
  %s3 = inlined_call_operand.vmem [shape: f32[2,4,8,8], index: 3, kind: input, shape index: {}]
  %s4 = inlined_call_operand.vmem [shape: f32[2,4,8,9], index: 4, kind: input, shape index: {}]
  %s5 = inlined_call_operand.vmem [shape: f32[2,4,8,8], index: 5, kind: input, shape index: {}]
  %s6 = inlined_call_operand.vmem [shape: f32[8,40], index: 6, kind: input, shape index: {}]
  %s7 = inlined_call_operand.vmem [shape: f32[8,1], index: 7, kind: input, shape index: {}]
  %s8 = inlined_call_operand.vmem [shape: f32[2,8,64], index: 8, kind: output, shape index: {}]
  %s9 = sld [smem:[#allocation0]]
  $region65: #{_lambda_.1} parent=0
    _
  %s11 = ssub.s32 1, %s9
  %s12 = scalar_select 0, %s11, %s9
  loop: start=0, step=1, limit=4
  $region2: #{_lambda_.1} parent=0 // loop_pre_header
    _
  $region3: #{_lambda_.1} parent=0 // loop_header
    %s14 = sphi 0, %s18
    %p15 = scmp.ge.s32.totalorder %s14, 4
    %s21 = sphi 0, %s33
    %s22 = sphi 0, %s29
    %s23 = sphi 0, %s21
    %s24 = sphi 0, %s22
    %s25 = sphi 0, %s23
    %s26 = sphi 0, %s24
    %s38 = sphi 0, %s40
    %s41 = sphi 0, %s38
    %s42 = sphi 0, %s41
    %s58 = sphi 0, %s42
    %s66 = sphi 0, %s68
    %s69 = sphi 0, %s66
    %s70 = sphi 0, %s69
    %s86 = sphi 0, %s70
    %s94 = sphi 0, %s96
    %s97 = sphi 0, %s94
    %s98 = sphi 0, %s97
    %s114 = sphi 0, %s98
    %s122 = sphi 0, %s124
    %s125 = sphi 0, %s122
    %s126 = sphi 0, %s125
    %s142 = sphi 0, %s126
    %s150 = sphi 0, %s152
    %s153 = sphi 0, %s150
    %s154 = sphi 0, %s153
    %s170 = sphi 0, %s154
    %s178 = sphi 0, %s180
    %s181 = sphi 0, %s178
    %s182 = sphi 0, %s181
    %s198 = sphi 0, %s182
    %s202 = sphi 0, %s202
    %s204 = sphi 0, %s202
    %s205 = sphi 0, %s204
    %s219 = sphi 0, %s205
    %s223 = sphi 0, %s223
    %s225 = sphi 0, %s223
    %s226 = sphi 0, %s225
    %s240 = sphi 0, %s226
    %s248 = sphi 0, %s250
    %s251 = sphi 0, %s248
    %s252 = sphi 0, %s251
    %s268 = sphi 0, %s252
  $region4: #{_lambda_.1} parent=0 // loop_header_branch
    %17 = sbr.rel (%p15) target = $region8
  $region5: #{_lambda_.1} parent=0 // loop_body
    %s19 = ssub.s32 %s14, 1
    %s20 = ssub.s32 %s14, 2
    %s27 = sadd.s32 1, %s22
    %p28 = scmp.ge.s32.totalorder %s27, 1
    %s29 = scalar_select %p28, 0, %s27
    %s30 = sadd.s32 1, %s21
    %s31 = scalar_select %p28, %s30, %s21
    %p32 = scmp.ge.s32.totalorder %s31, 2
    %s33 = scalar_select %p32, 0, %s31
    %s34 = ssub.s32 %s21, %s33
    %s35 = ssub.s32 %s22, %s29
    %s36 = sor.u32 %s34, %s35
    %p37 = scmp.eq.s32.totalorder %s36, 0
    %s39 = sadd.s32 %s38, 1
    %s40 = scalar_select %p37, %s38, %s39
    %p43 = pneg %p37
    %p44 = scmp.eq.s32.totalorder %s14, 1
    %p45 = por %p43, %p44
    %p46 = scmp.ne.s32.totalorder %s38, %s41
    %p47 = scmp.eq.s32.totalorder %s14, 0
    %p48 = por %p46, %p47
    %p49 = scmp.ne.s32.totalorder %s38, %s41
    %p50 = scmp.eq.s32.totalorder %s19, 1
    %p51 = por %p49, %p50
    %p52 = scmp.ne.s32.totalorder %s41, %s42
    %p53 = scmp.eq.s32.totalorder %s19, 0
    %p54 = por %p52, %p53
    %p55 = scmp.ne.s32.totalorder %s41, %s42
    %p56 = scmp.eq.s32.totalorder %s20, 1
    %p57 = por %p55, %p56
    %p59 = scmp.ne.s32.totalorder %s42, %s58
    %p60 = scmp.eq.s32.totalorder %s20, 0
    %p61 = por %p59, %p60
    %s62 = ssub.s32 %s21, %s33
    %s63 = ssub.s32 %s22, %s29
    %s64 = sor.u32 %s62, %s63
    %p65 = scmp.eq.s32.totalorder %s64, 0
    %s67 = sadd.s32 %s66, 1
    %s68 = scalar_select %p65, %s66, %s67
    %p71 = pneg %p65
    %p72 = scmp.eq.s32.totalorder %s14, 1
    %p73 = por %p71, %p72
    %p74 = scmp.ne.s32.totalorder %s66, %s69
    %p75 = scmp.eq.s32.totalorder %s14, 0
    %p76 = por %p74, %p75
    %p77 = scmp.ne.s32.totalorder %s66, %s69
    %p78 = scmp.eq.s32.totalorder %s19, 1
    %p79 = por %p77, %p78
    %p80 = scmp.ne.s32.totalorder %s69, %s70
    %p81 = scmp.eq.s32.totalorder %s19, 0
    %p82 = por %p80, %p81
    %p83 = scmp.ne.s32.totalorder %s69, %s70
    %p84 = scmp.eq.s32.totalorder %s20, 1
    %p85 = por %p83, %p84
    %p87 = scmp.ne.s32.totalorder %s70, %s86
    %p88 = scmp.eq.s32.totalorder %s20, 0
    %p89 = por %p87, %p88
    %s90 = ssub.s32 %s21, %s33
    %s91 = ssub.s32 %s22, %s29
    %s92 = sor.u32 %s90, %s91
    %p93 = scmp.eq.s32.totalorder %s92, 0
    %s95 = sadd.s32 %s94, 1
    %s96 = scalar_select %p93, %s94, %s95
    %p99 = pneg %p93
    %p100 = scmp.eq.s32.totalorder %s14, 1
    %p101 = por %p99, %p100
    %p102 = scmp.ne.s32.totalorder %s94, %s97
    %p103 = scmp.eq.s32.totalorder %s14, 0
    %p104 = por %p102, %p103
    %p105 = scmp.ne.s32.totalorder %s94, %s97
    %p106 = scmp.eq.s32.totalorder %s19, 1
    %p107 = por %p105, %p106
    %p108 = scmp.ne.s32.totalorder %s97, %s98
    %p109 = scmp.eq.s32.totalorder %s19, 0
    %p110 = por %p108, %p109
    %p111 = scmp.ne.s32.totalorder %s97, %s98
    %p112 = scmp.eq.s32.totalorder %s20, 1
    %p113 = por %p111, %p112
    %p115 = scmp.ne.s32.totalorder %s98, %s114
    %p116 = scmp.eq.s32.totalorder %s20, 0
    %p117 = por %p115, %p116
    %s118 = ssub.s32 %s21, %s33
    %s119 = ssub.s32 %s22, %s29
    %s120 = sor.u32 %s118, %s119
    %p121 = scmp.eq.s32.totalorder %s120, 0
    %s123 = sadd.s32 %s122, 1
    %s124 = scalar_select %p121, %s122, %s123
    %p127 = pneg %p121
    %p128 = scmp.eq.s32.totalorder %s14, 1
    %p129 = por %p127, %p128
    %p130 = scmp.ne.s32.totalorder %s122, %s125
    %p131 = scmp.eq.s32.totalorder %s14, 0
    %p132 = por %p130, %p131
    %p133 = scmp.ne.s32.totalorder %s122, %s125
    %p134 = scmp.eq.s32.totalorder %s19, 1
    %p135 = por %p133, %p134
    %p136 = scmp.ne.s32.totalorder %s125, %s126
    %p137 = scmp.eq.s32.totalorder %s19, 0
    %p138 = por %p136, %p137
    %p139 = scmp.ne.s32.totalorder %s125, %s126
    %p140 = scmp.eq.s32.totalorder %s20, 1
    %p141 = por %p139, %p140
    %p143 = scmp.ne.s32.totalorder %s126, %s142
    %p144 = scmp.eq.s32.totalorder %s20, 0
    %p145 = por %p143, %p144
    %s146 = ssub.s32 %s21, %s33
    %s147 = ssub.s32 %s22, %s29
    %s148 = sor.u32 %s146, %s147
    %p149 = scmp.eq.s32.totalorder %s148, 0
    %s151 = sadd.s32 %s150, 1
    %s152 = scalar_select %p149, %s150, %s151
    %p155 = pneg %p149
    %p156 = scmp.eq.s32.totalorder %s14, 1
    %p157 = por %p155, %p156
    %p158 = scmp.ne.s32.totalorder %s150, %s153
    %p159 = scmp.eq.s32.totalorder %s14, 0
    %p160 = por %p158, %p159
    %p161 = scmp.ne.s32.totalorder %s150, %s153
    %p162 = scmp.eq.s32.totalorder %s19, 1
    %p163 = por %p161, %p162
    %p164 = scmp.ne.s32.totalorder %s153, %s154
    %p165 = scmp.eq.s32.totalorder %s19, 0
    %p166 = por %p164, %p165
    %p167 = scmp.ne.s32.totalorder %s153, %s154
    %p168 = scmp.eq.s32.totalorder %s20, 1
    %p169 = por %p167, %p168
    %p171 = scmp.ne.s32.totalorder %s154, %s170
    %p172 = scmp.eq.s32.totalorder %s20, 0
    %p173 = por %p171, %p172
    %s174 = ssub.s32 %s21, %s33
    %s175 = ssub.s32 %s22, %s29
    %s176 = sor.u32 %s174, %s175
    %p177 = scmp.eq.s32.totalorder %s176, 0
    %s179 = sadd.s32 %s178, 1
    %s180 = scalar_select %p177, %s178, %s179
    %p183 = pneg %p177
    %p184 = scmp.eq.s32.totalorder %s14, 1
    %p185 = por %p183, %p184
    %p186 = scmp.ne.s32.totalorder %s178, %s181
    %p187 = scmp.eq.s32.totalorder %s14, 0
    %p188 = por %p186, %p187
    %p189 = scmp.ne.s32.totalorder %s178, %s181
    %p190 = scmp.eq.s32.totalorder %s19, 1
    %p191 = por %p189, %p190
    %p192 = scmp.ne.s32.totalorder %s181, %s182
    %p193 = scmp.eq.s32.totalorder %s19, 0
    %p194 = por %p192, %p193
    %p195 = scmp.ne.s32.totalorder %s181, %s182
    %p196 = scmp.eq.s32.totalorder %s20, 1
    %p197 = por %p195, %p196
    %p199 = scmp.ne.s32.totalorder %s182, %s198
    %p200 = scmp.eq.s32.totalorder %s20, 0
    %p201 = por %p199, %p200
    %s203 = sadd.s32 %s202, 1
    %p206 = scmp.eq.s32.totalorder %s14, 1
    %p207 = scmp.ne.s32.totalorder %s202, %s204
    %p208 = scmp.eq.s32.totalorder %s14, 0
    %p209 = por %p207, %p208
    %p210 = scmp.ne.s32.totalorder %s202, %s204
    %p211 = scmp.eq.s32.totalorder %s19, 1
    %p212 = por %p210, %p211
    %p213 = scmp.ne.s32.totalorder %s204, %s205
    %p214 = scmp.eq.s32.totalorder %s19, 0
    %p215 = por %p213, %p214
    %p216 = scmp.ne.s32.totalorder %s204, %s205
    %p217 = scmp.eq.s32.totalorder %s20, 1
    %p218 = por %p216, %p217
    %p220 = scmp.ne.s32.totalorder %s205, %s219
    %p221 = scmp.eq.s32.totalorder %s20, 0
    %p222 = por %p220, %p221
    %s224 = sadd.s32 %s223, 1
    %p227 = scmp.eq.s32.totalorder %s14, 1
    %p228 = scmp.ne.s32.totalorder %s223, %s225
    %p229 = scmp.eq.s32.totalorder %s14, 0
    %p230 = por %p228, %p229
    %p231 = scmp.ne.s32.totalorder %s223, %s225
    %p232 = scmp.eq.s32.totalorder %s19, 1
    %p233 = por %p231, %p232
    %p234 = scmp.ne.s32.totalorder %s225, %s226
    %p235 = scmp.eq.s32.totalorder %s19, 0
    %p236 = por %p234, %p235
    %p237 = scmp.ne.s32.totalorder %s225, %s226
    %p238 = scmp.eq.s32.totalorder %s20, 1
    %p239 = por %p237, %p238
    %p241 = scmp.ne.s32.totalorder %s226, %s240
    %p242 = scmp.eq.s32.totalorder %s20, 0
    %p243 = por %p241, %p242
    %s244 = ssub.s32 %s21, %s33
    %s245 = ssub.s32 %s22, %s29
    %s246 = sor.u32 %s244, %s245
    %p247 = scmp.eq.s32.totalorder %s246, 0
    %s249 = sadd.s32 %s248, 1
    %s250 = scalar_select %p247, %s248, %s249
    %p253 = pneg %p247
    %p254 = scmp.eq.s32.totalorder %s14, 1
    %p255 = por %p253, %p254
    %p256 = scmp.ne.s32.totalorder %s248, %s251
    %p257 = scmp.eq.s32.totalorder %s14, 0
    %p258 = por %p256, %p257
    %p259 = scmp.ne.s32.totalorder %s248, %s251
    %p260 = scmp.eq.s32.totalorder %s19, 1
    %p261 = por %p259, %p260
    %p262 = scmp.ne.s32.totalorder %s251, %s252
    %p263 = scmp.eq.s32.totalorder %s19, 0
    %p264 = por %p262, %p263
    %p265 = scmp.ne.s32.totalorder %s251, %s252
    %p266 = scmp.eq.s32.totalorder %s20, 1
    %p267 = por %p265, %p266
    %p269 = scmp.ne.s32.totalorder %s252, %s268
    %p270 = scmp.eq.s32.totalorder %s20, 0
    %p271 = por %p269, %p270
    %p272 = scmp.le.s32.totalorder 1, %s14
    %p273 = scmp.lt.s32.totalorder %s14, 3
    %p274 = pnand %p272, %p273
    %p275 = pneg %p274
    // Predicated region
    $region9: #{_lambda_.1} parent=5 // pred_check
      _
    $region10: #{_lambda_.1} parent=5 // pred_check_branch
      %277 = sbr.rel (%p274) target = $region12
    $region11: #{_lambda_.1} parent=5 // pred_region
      %s278 = ssub.s32 %s14, 1
      // Predicated region
      $region13: #{_lambda_.1} parent=11 // pred_check
        %p279 = pneg %p215
      $region14: #{_lambda_.1} parent=11 // pred_check_branch
        %281 = sbr.rel (%p279) target = $region16
      $region15: #{_lambda_.1} parent=11 // pred_region
        _
      $region16: #{_lambda_.1} parent=11 // pred_fallthru
        _
      // Predicated region
      $region17: #{_lambda_.1} parent=11 // pred_check
        %p282 = pneg %p236
      $region18: #{_lambda_.1} parent=11 // pred_check_branch
        %284 = sbr.rel (%p282) target = $region20
      $region19: #{_lambda_.1} parent=11 // pred_region
        _
      $region20: #{_lambda_.1} parent=11 // pred_fallthru
        _
    $region12: #{_lambda_.1} parent=5 // pred_fallthru
      _
    %p285 = scmp.lt.s32.totalorder %s14, 2
    // Predicated region
    $region21: #{_lambda_.1} parent=5 // pred_check
      %p286 = pneg %p285
    $region22: #{_lambda_.1} parent=5 // pred_check_branch
      %288 = sbr.rel (%p286) target = $region24
    $region23: #{_lambda_.1} parent=5 // pred_region
      // Predicated region
      $region25: #{_lambda_.1} parent=23 // pred_check
        %p289 = pneg %p48
      $region26: #{_lambda_.1} parent=23 // pred_check_branch
        %291 = sbr.rel (%p289) target = $region28
      $region27: #{_lambda_.1} parent=23 // pred_region
        %p292 = scmp.lt.s32.totalorder %s21, 1
        %s293 = scalar_select %p292, %s21, 1
        %p294 = scmp.lt.s32.totalorder %s22, 0
        %s295 = scalar_select %p294, %s22, 0
        %s296 = smul.addr %s293, 4
        %s297 = sadd.s32 %s295, %s296
        %s298 = smul.addr %s297, 8
        %s299 = scalar_lea.vmem %s0, %s298
      $region28: #{_lambda_.1} parent=23 // pred_fallthru
        _
      // Predicated region
      $region29: #{_lambda_.1} parent=23 // pred_check
        %p300 = pneg %p76
      $region30: #{_lambda_.1} parent=23 // pred_check_branch
        %302 = sbr.rel (%p300) target = $region32
      $region31: #{_lambda_.1} parent=23 // pred_region
        %p303 = scmp.lt.s32.totalorder %s21, 1
        %s304 = scalar_select %p303, %s21, 1
        %p305 = scmp.lt.s32.totalorder %s22, 0
        %s306 = scalar_select %p305, %s22, 0
        %s307 = smul.addr %s304, 4
        %s308 = sadd.s32 %s306, %s307
        %s309 = smul.addr %s308, 8
        %s310 = scalar_lea.vmem %s1, %s309
      $region32: #{_lambda_.1} parent=23 // pred_fallthru
        _
      // Predicated region
      $region33: #{_lambda_.1} parent=23 // pred_check
        %p311 = pneg %p104
      $region34: #{_lambda_.1} parent=23 // pred_check_branch
        %313 = sbr.rel (%p311) target = $region36
      $region35: #{_lambda_.1} parent=23 // pred_region
        %p314 = scmp.lt.s32.totalorder %s21, 1
        %s315 = scalar_select %p314, %s21, 1
        %p316 = scmp.lt.s32.totalorder %s22, 0
        %s317 = scalar_select %p316, %s22, 0
        %s318 = smul.addr %s315, 4
        %s319 = sadd.s32 %s317, %s318
        %s320 = smul.addr %s319, 8
        %s321 = scalar_lea.vmem %s2, %s320
      $region36: #{_lambda_.1} parent=23 // pred_fallthru
        _
      // Predicated region
      $region37: #{_lambda_.1} parent=23 // pred_check
        %p322 = pneg %p132
      $region38: #{_lambda_.1} parent=23 // pred_check_branch
        %324 = sbr.rel (%p322) target = $region40
      $region39: #{_lambda_.1} parent=23 // pred_region
        %p325 = scmp.lt.s32.totalorder %s21, 1
        %s326 = scalar_select %p325, %s21, 1
        %p327 = scmp.lt.s32.totalorder %s22, 0
        %s328 = scalar_select %p327, %s22, 0
        %s329 = smul.addr %s326, 4
        %s330 = sadd.s32 %s328, %s329
        %s331 = smul.addr %s330, 8
        %s332 = scalar_lea.vmem %s3, %s331
      $region40: #{_lambda_.1} parent=23 // pred_fallthru
        _
      // Predicated region
      $region41: #{_lambda_.1} parent=23 // pred_check
        %p333 = pneg %p160
      $region42: #{_lambda_.1} parent=23 // pred_check_branch
        %335 = sbr.rel (%p333) target = $region44
      $region43: #{_lambda_.1} parent=23 // pred_region
        %p336 = scmp.lt.s32.totalorder %s21, 1
        %s337 = scalar_select %p336, %s21, 1
        %p338 = scmp.lt.s32.totalorder %s22, 0
        %s339 = scalar_select %p338, %s22, 0
        %s340 = smul.addr %s337, 4
        %s341 = sadd.s32 %s339, %s340
        %s342 = smul.addr %s341, 8
        %s343 = scalar_lea.vmem %s4, %s342
      $region44: #{_lambda_.1} parent=23 // pred_fallthru
        _
      // Predicated region
      $region45: #{_lambda_.1} parent=23 // pred_check
        %p344 = pneg %p188
      $region46: #{_lambda_.1} parent=23 // pred_check_branch
        %346 = sbr.rel (%p344) target = $region48
      $region47: #{_lambda_.1} parent=23 // pred_region
        %p347 = scmp.lt.s32.totalorder %s21, 1
        %s348 = scalar_select %p347, %s21, 1
        %p349 = scmp.lt.s32.totalorder %s22, 0
        %s350 = scalar_select %p349, %s22, 0
        %s351 = smul.addr %s348, 4
        %s352 = sadd.s32 %s350, %s351
        %s353 = smul.addr %s352, 8
        %s354 = scalar_lea.vmem %s5, %s353
      $region48: #{_lambda_.1} parent=23 // pred_fallthru
        _
    $region24: #{_lambda_.1} parent=5 // pred_fallthru
      _
    %p355 = scmp.le.s32.totalorder 1, %s14
    %p356 = scmp.lt.s32.totalorder %s14, 3
    %p357 = pnand %p355, %p356
    %p358 = pneg %p357
    // Predicated region
    $region49: #{_lambda_.1} parent=5 // pred_check
      _
    $region50: #{_lambda_.1} parent=5 // pred_check_branch
      %360 = sbr.rel (%p357) target = $region52
    $region51: #{_lambda_.1} parent=5 // pred_region
      %s361 = ssub.s32 %s14, 1
      %p362 = scmp.lt.s32.totalorder %s23, 1
      %s363 = scalar_select %p362, %s23, 1
      %p364 = scmp.lt.s32.totalorder %s24, 0
      %s365 = scalar_select %p364, %s24, 0
      %s366 = smul.addr %s363, 4
      %s367 = sadd.s32 %s365, %s366
      %s368 = smul.addr %s367, 8
      %s369 = scalar_lea.vmem %s0, %s368
      %p370 = pneg %p54
      %p371 = pneg %p51
      %p372 = scmp.lt.s32.totalorder %s23, 1
      %s373 = scalar_select %p372, %s23, 1
      %p374 = scmp.lt.s32.totalorder %s24, 0
      %s375 = scalar_select %p374, %s24, 0
      %s376 = smul.addr %s373, 4
      %s377 = sadd.s32 %s375, %s376
      %s378 = smul.addr %s377, 8
      %s379 = scalar_lea.vmem %s1, %s378
      %p380 = pneg %p82
      %p381 = pneg %p79
      %p382 = scmp.lt.s32.totalorder %s23, 1
      %s383 = scalar_select %p382, %s23, 1
      %p384 = scmp.lt.s32.totalorder %s24, 0
      %s385 = scalar_select %p384, %s24, 0
      %s386 = smul.addr %s383, 4
      %s387 = sadd.s32 %s385, %s386
      %s388 = smul.addr %s387, 8
      %s389 = scalar_lea.vmem %s2, %s388
      %p390 = pneg %p110
      %p391 = pneg %p107
      %p392 = scmp.lt.s32.totalorder %s23, 1
      %s393 = scalar_select %p392, %s23, 1
      %p394 = scmp.lt.s32.totalorder %s24, 0
      %s395 = scalar_select %p394, %s24, 0
      %s396 = smul.addr %s393, 4
      %s397 = sadd.s32 %s395, %s396
      %s398 = smul.addr %s397, 8
      %s399 = scalar_lea.vmem %s3, %s398
      %p400 = pneg %p138
      %p401 = pneg %p135
      %p402 = scmp.lt.s32.totalorder %s23, 1
      %s403 = scalar_select %p402, %s23, 1
      %p404 = scmp.lt.s32.totalorder %s24, 0
      %s405 = scalar_select %p404, %s24, 0
      %s406 = smul.addr %s403, 4
      %s407 = sadd.s32 %s405, %s406
      %s408 = smul.addr %s407, 8
      %s409 = scalar_lea.vmem %s4, %s408
      %p410 = pneg %p166
      %p411 = pneg %p163
      %p412 = scmp.lt.s32.totalorder %s23, 1
      %s413 = scalar_select %p412, %s23, 1
      %p414 = scmp.lt.s32.totalorder %s24, 0
      %s415 = scalar_select %p414, %s24, 0
      %s416 = smul.addr %s413, 4
      %s417 = sadd.s32 %s415, %s416
      %s418 = smul.addr %s417, 8
      %s419 = scalar_lea.vmem %s5, %s418
      %p420 = pneg %p194
      %p421 = pneg %p191
      %p422 = pneg %p215
      %p423 = pneg %p212
      %p424 = pneg %p236
      %p425 = pneg %p233
      %p426 = pneg %p264
      %p427 = pneg %p261
      %p428 = scmp.lt.s32.totalorder %s23, 1
      %s429 = scalar_select %p428, %s23, 1
      %p430 = scmp.lt.s32.totalorder %s24, 0
      %s431 = scalar_select %p430, %s24, 0
      %s432 = sadd.s32 %s431, %s429
      %s433 = smul.addr %s432, 8
      %s434 = scalar_lea.vmem %s8, %s433
      %p435 = scmp.lt.s32.totalorder %s23, 1
      %s436 = scalar_select %p435, %s23, 1
      %p437 = scmp.lt.s32.totalorder %s24, 0
      %s438 = scalar_select %p437, %s24, 0
      %s439 = smul.addr %s436, 4
      %s440 = sadd.s32 %s438, %s439
      %s441 = smul.addr %s440, 8
      %s442 = scalar_lea.vmem %s0, %s441
      %p443 = scmp.lt.s32.totalorder %s23, 1
      %s444 = scalar_select %p443, %s23, 1
      %p445 = scmp.lt.s32.totalorder %s24, 0
      %s446 = scalar_select %p445, %s24, 0
      %s447 = smul.addr %s444, 4
      %s448 = sadd.s32 %s446, %s447
      %s449 = smul.addr %s448, 8
      %s450 = scalar_lea.vmem %s1, %s449
      %p451 = scmp.lt.s32.totalorder %s23, 1
      %s452 = scalar_select %p451, %s23, 1
      %p453 = scmp.lt.s32.totalorder %s24, 0
      %s454 = scalar_select %p453, %s24, 0
      %s455 = smul.addr %s452, 4
      %s456 = sadd.s32 %s454, %s455
      %s457 = smul.addr %s456, 8
      %s458 = scalar_lea.vmem %s2, %s457
      %p459 = scmp.lt.s32.totalorder %s23, 1
      %s460 = scalar_select %p459, %s23, 1
      %p461 = scmp.lt.s32.totalorder %s24, 0
      %s462 = scalar_select %p461, %s24, 0
      %s463 = smul.addr %s460, 4
      %s464 = sadd.s32 %s462, %s463
      %s465 = smul.addr %s464, 8
      %s466 = scalar_lea.vmem %s3, %s465
      %p467 = scmp.lt.s32.totalorder %s23, 1
      %s468 = scalar_select %p467, %s23, 1
      %p469 = scmp.lt.s32.totalorder %s24, 0
      %s470 = scalar_select %p469, %s24, 0
      %s471 = smul.addr %s468, 4
      %s472 = sadd.s32 %s470, %s471
      %s473 = smul.addr %s472, 8
      %s474 = scalar_lea.vmem %s4, %s473
      %p475 = scmp.lt.s32.totalorder %s23, 1
      %s476 = scalar_select %p475, %s23, 1
      %p477 = scmp.lt.s32.totalorder %s24, 0
      %s478 = scalar_select %p477, %s24, 0
      %s479 = smul.addr %s476, 4
      %s480 = sadd.s32 %s478, %s479
      %s481 = smul.addr %s480, 8
      %s482 = scalar_lea.vmem %s5, %s481
      %p483 = scmp.lt.s32.totalorder %s23, 1
      %s484 = scalar_select %p483, %s23, 1
      %p485 = scmp.lt.s32.totalorder %s24, 0
      %s486 = scalar_select %p485, %s24, 0
      %s487 = sadd.s32 %s486, %s484
      %s488 = smul.addr %s487, 8
      %s489 = scalar_lea.vmem %s8, %s488
      %vm490 = vcmask 519168
      %491 = vst.msk [vmem:[#allocation2 + $0x24] sm:$0xf] %vm490, 0.0
      %v492 = vld [vmem:[%s442] sm:$0x1]
      %v493 = vld [vmem:[%s442 + $0x8] sm:$0x1]
      %v494 = vld [vmem:[%s442 + $0x10] sm:$0x1]
      %v495 = vld [vmem:[%s442 + $0x18] sm:$0x1]
      %v496 = vld [vmem:[%s450] sm:$0x1]
      %v497 = vld [vmem:[%s450 + $0x8] sm:$0x1]
      %v498 = vld [vmem:[%s450 + $0x10] sm:$0x1]
      %v499 = vld [vmem:[%s450 + $0x18] sm:$0x1]
      %v504 = vrot.slane %v493, 7
      %vm505 = vcmask 1041409
      %v506 = vsel %vm505, %v504, %v492
      %v507 = vrot.slane %v494, 6
      %vm508 = vcmask 1042434
      %v509 = vsel %vm508, %v507, %v506
      %v510 = vrot.slane %v495, 5
      %vm511 = vcmask 1043459
      %v512 = vsel %vm511, %v510, %v509
      %vm514 = vcmask 60416
      %515 = vst.msk [vmem:[#allocation2] sm:$0xf] %vm514, %v512
      %v520 = vrot.slane %v497, 7
      %v521 = vsel %vm505, %v520, %v496
      %v522 = vrot.slane %v498, 6
      %v523 = vsel %vm508, %v522, %v521
      %v524 = vrot.slane %v499, 5
      %v525 = vsel %vm511, %v524, %v523
      %527 = vst.msk [vmem:[#allocation2 + $0x4] sm:$0xf] %vm514, %v525
      %528 = vrot.lane.b32.xlu0 %v512, 127
      %v529 = vpop.permute.xlu0 %528
      %531 = vst.msk [vmem:[#allocation2 + $0x8] sm:$0xf] %vm514, %v529
      %v532 = vld [vmem:[%s458] sm:$0x1]
      %v533 = vld [vmem:[%s458 + $0x8] sm:$0x1]
      %v534 = vld [vmem:[%s458 + $0x10] sm:$0x1]
      %v535 = vld [vmem:[%s458 + $0x18] sm:$0x1]
      %v536 = vld [vmem:[%s466] sm:$0x1]
      %v537 = vld [vmem:[%s466 + $0x8] sm:$0x1]
      %v538 = vld [vmem:[%s466 + $0x10] sm:$0x1]
      %v539 = vld [vmem:[%s466 + $0x18] sm:$0x1]
      %v544 = vrot.slane %v533, 7
      %v545 = vsel %vm505, %v544, %v532
      %v546 = vrot.slane %v534, 6
      %v547 = vsel %vm508, %v546, %v545
      %v548 = vrot.slane %v535, 5
      %v549 = vsel %vm511, %v548, %v547
      %551 = vst.msk [vmem:[#allocation2 + $0xc] sm:$0xf] %vm514, %v549
      %v556 = vrot.slane %v537, 7
      %v557 = vsel %vm505, %v556, %v536
      %v558 = vrot.slane %v538, 6
      %v559 = vsel %vm508, %v558, %v557
      %v560 = vrot.slane %v539, 5
      %v561 = vsel %vm511, %v560, %v559
      %563 = vst.msk [vmem:[#allocation2 + $0x10] sm:$0xf] %vm514, %v561
      %564 = vrot.lane.b32.xlu0 %v549, 127
      %v565 = vpop.permute.xlu0 %564
      %567 = vst.msk [vmem:[#allocation2 + $0x14] sm:$0xf] %vm514, %v565
      %v568 = vld [vmem:[%s474] sm:$0x1]
      %v569 = vld [vmem:[%s474 + $0x8] sm:$0x1]
      %v570 = vld [vmem:[%s474 + $0x10] sm:$0x1]
      %v571 = vld [vmem:[%s474 + $0x18] sm:$0x1]
      %v572 = vld [vmem:[%s482] sm:$0x1]
      %v573 = vld [vmem:[%s482 + $0x8] sm:$0x1]
      %v574 = vld [vmem:[%s482 + $0x10] sm:$0x1]
      %v575 = vld [vmem:[%s482 + $0x18] sm:$0x1]
      %v580 = vrot.slane %v569, 7
      %v581 = vsel %vm505, %v580, %v568
      %v582 = vrot.slane %v570, 6
      %v583 = vsel %vm508, %v582, %v581
      %v584 = vrot.slane %v571, 5
      %v585 = vsel %vm511, %v584, %v583
      %587 = vst.msk [vmem:[#allocation2 + $0x18] sm:$0xf] %vm514, %v585
      %v592 = vrot.slane %v573, 7
      %v593 = vsel %vm505, %v592, %v572
      %v594 = vrot.slane %v574, 6
      %v595 = vsel %vm508, %v594, %v593
      %v596 = vrot.slane %v575, 5
      %v597 = vsel %vm511, %v596, %v595
      %599 = vst.msk [vmem:[#allocation2 + $0x1c] sm:$0xf] %vm514, %v597
      %600 = vrot.lane.b32.xlu0 %v585, 127
      %v601 = vpop.permute.xlu0 %600
      %603 = vst.msk [vmem:[#allocation2 + $0x20] sm:$0xf] %vm514, %v601
      %v604 = vld [vmem:[%s442 + $0x1] sm:$0x1]
      %v605 = vld [vmem:[%s442 + $0x9] sm:$0x1]
      %v606 = vld [vmem:[%s442 + $0x11] sm:$0x1]
      %v607 = vld [vmem:[%s442 + $0x19] sm:$0x1]
      %v608 = vld [vmem:[%s450 + $0x1] sm:$0x1]
      %v609 = vld [vmem:[%s450 + $0x9] sm:$0x1]
      %v610 = vld [vmem:[%s450 + $0x11] sm:$0x1]
      %v611 = vld [vmem:[%s450 + $0x19] sm:$0x1]
      %v616 = vrot.slane %v605, 7
      %v617 = vsel %vm505, %v616, %v604
      %v618 = vrot.slane %v606, 6
      %v619 = vsel %vm508, %v618, %v617
      %v620 = vrot.slane %v607, 5
      %v621 = vsel %vm511, %v620, %v619
      %622 = vrot.lane.b32.xlu0 %v621, 8
      %v623 = vpop.permute.xlu0 %622
      %vm625 = vcmask 126016
      %626 = vst.msk [vmem:[#allocation2] sm:$0xf] %vm625, %v623
      %v631 = vrot.slane %v609, 7
      %v632 = vsel %vm505, %v631, %v608
      %v633 = vrot.slane %v610, 6
      %v634 = vsel %vm508, %v633, %v632
      %v635 = vrot.slane %v611, 5
      %v636 = vsel %vm511, %v635, %v634
      %637 = vrot.lane.b32.xlu0 %v636, 8
      %v638 = vpop.permute.xlu0 %637
      %640 = vst.msk [vmem:[#allocation2 + $0x4] sm:$0xf] %vm625, %v638
      %641 = vrot.lane.b32.xlu0 %v621, 7
      %v642 = vpop.permute.xlu0 %641
      %644 = vst.msk [vmem:[#allocation2 + $0x8] sm:$0xf] %vm625, %v642
      %v645 = vld [vmem:[%s458 + $0x1] sm:$0x1]
      %v646 = vld [vmem:[%s458 + $0x9] sm:$0x1]
      %v647 = vld [vmem:[%s458 + $0x11] sm:$0x1]
      %v648 = vld [vmem:[%s458 + $0x19] sm:$0x1]
      %v649 = vld [vmem:[%s466 + $0x1] sm:$0x1]
      %v650 = vld [vmem:[%s466 + $0x9] sm:$0x1]
      %v651 = vld [vmem:[%s466 + $0x11] sm:$0x1]
      %v652 = vld [vmem:[%s466 + $0x19] sm:$0x1]
      %v657 = vrot.slane %v646, 7
      %v658 = vsel %vm505, %v657, %v645
      %v659 = vrot.slane %v647, 6
      %v660 = vsel %vm508, %v659, %v658
      %v661 = vrot.slane %v648, 5
      %v662 = vsel %vm511, %v661, %v660
      %663 = vrot.lane.b32.xlu0 %v662, 8
      %v664 = vpop.permute.xlu0 %663
      %666 = vst.msk [vmem:[#allocation2 + $0xc] sm:$0xf] %vm625, %v664
      %v671 = vrot.slane %v650, 7
      %v672 = vsel %vm505, %v671, %v649
      %v673 = vrot.slane %v651, 6
      %v674 = vsel %vm508, %v673, %v672
      %v675 = vrot.slane %v652, 5
      %v676 = vsel %vm511, %v675, %v674
      %677 = vrot.lane.b32.xlu0 %v676, 8
      %v678 = vpop.permute.xlu0 %677
      %680 = vst.msk [vmem:[#allocation2 + $0x10] sm:$0xf] %vm625, %v678
      %681 = vrot.lane.b32.xlu0 %v662, 7
      %v682 = vpop.permute.xlu0 %681
      %684 = vst.msk [vmem:[#allocation2 + $0x14] sm:$0xf] %vm625, %v682
      %v685 = vld [vmem:[%s474 + $0x1] sm:$0x1]
      %v686 = vld [vmem:[%s474 + $0x9] sm:$0x1]
      %v687 = vld [vmem:[%s474 + $0x11] sm:$0x1]
      %v688 = vld [vmem:[%s474 + $0x19] sm:$0x1]
      %v689 = vld [vmem:[%s482 + $0x1] sm:$0x1]
      %v690 = vld [vmem:[%s482 + $0x9] sm:$0x1]
      %v691 = vld [vmem:[%s482 + $0x11] sm:$0x1]
      %v692 = vld [vmem:[%s482 + $0x19] sm:$0x1]
      %v697 = vrot.slane %v686, 7
      %v698 = vsel %vm505, %v697, %v685
      %v699 = vrot.slane %v687, 6
      %v700 = vsel %vm508, %v699, %v698
      %v701 = vrot.slane %v688, 5
      %v702 = vsel %vm511, %v701, %v700
      %703 = vrot.lane.b32.xlu0 %v702, 8
      %v704 = vpop.permute.xlu0 %703
      %706 = vst.msk [vmem:[#allocation2 + $0x18] sm:$0xf] %vm625, %v704
      %v711 = vrot.slane %v690, 7
      %v712 = vsel %vm505, %v711, %v689
      %v713 = vrot.slane %v691, 6
      %v714 = vsel %vm508, %v713, %v712
      %v715 = vrot.slane %v692, 5
      %v716 = vsel %vm511, %v715, %v714
      %717 = vrot.lane.b32.xlu0 %v716, 8
      %v718 = vpop.permute.xlu0 %717
      %720 = vst.msk [vmem:[#allocation2 + $0x1c] sm:$0xf] %vm625, %v718
      %721 = vrot.lane.b32.xlu0 %v702, 7
      %v722 = vpop.permute.xlu0 %721
      %724 = vst.msk [vmem:[#allocation2 + $0x20] sm:$0xf] %vm625, %v722
      %v725 = vld [vmem:[%s442 + $0x2] sm:$0x1]
      %v726 = vld [vmem:[%s442 + $0xa] sm:$0x1]
      %v727 = vld [vmem:[%s442 + $0x12] sm:$0x1]
      %v728 = vld [vmem:[%s442 + $0x1a] sm:$0x1]
      %v729 = vld [vmem:[%s450 + $0x2] sm:$0x1]
      %v730 = vld [vmem:[%s450 + $0xa] sm:$0x1]
      %v731 = vld [vmem:[%s450 + $0x12] sm:$0x1]
      %v732 = vld [vmem:[%s450 + $0x1a] sm:$0x1]
      %v737 = vrot.slane %v726, 7
      %v738 = vsel %vm505, %v737, %v725
      %v739 = vrot.slane %v727, 6
      %v740 = vsel %vm508, %v739, %v738
      %v741 = vrot.slane %v728, 5
      %v742 = vsel %vm511, %v741, %v740
      %743 = vrot.lane.b32.xlu0 %v742, 16
      %v744 = vpop.permute.xlu0 %743
      %vm746 = vcmask 191616
      %747 = vst.msk [vmem:[#allocation2] sm:$0xf] %vm746, %v744
      %v752 = vrot.slane %v730, 7
      %v753 = vsel %vm505, %v752, %v729
      %v754 = vrot.slane %v731, 6
      %v755 = vsel %vm508, %v754, %v753
      %v756 = vrot.slane %v732, 5
      %v757 = vsel %vm511, %v756, %v755
      %758 = vrot.lane.b32.xlu0 %v757, 16
      %v759 = vpop.permute.xlu0 %758
      %761 = vst.msk [vmem:[#allocation2 + $0x4] sm:$0xf] %vm746, %v759
      %762 = vrot.lane.b32.xlu0 %v742, 15
      %v763 = vpop.permute.xlu0 %762
      %765 = vst.msk [vmem:[#allocation2 + $0x8] sm:$0xf] %vm746, %v763
      %v766 = vld [vmem:[%s458 + $0x2] sm:$0x1]
      %v767 = vld [vmem:[%s458 + $0xa] sm:$0x1]
      %v768 = vld [vmem:[%s458 + $0x12] sm:$0x1]
      %v769 = vld [vmem:[%s458 + $0x1a] sm:$0x1]
      %v770 = vld [vmem:[%s466 + $0x2] sm:$0x1]
      %v771 = vld [vmem:[%s466 + $0xa] sm:$0x1]
      %v772 = vld [vmem:[%s466 + $0x12] sm:$0x1]
      %v773 = vld [vmem:[%s466 + $0x1a] sm:$0x1]
      %v778 = vrot.slane %v767, 7
      %v779 = vsel %vm505, %v778, %v766
      %v780 = vrot.slane %v768, 6
      %v781 = vsel %vm508, %v780, %v779
      %v782 = vrot.slane %v769, 5
      %v783 = vsel %vm511, %v782, %v781
      %784 = vrot.lane.b32.xlu0 %v783, 16
      %v785 = vpop.permute.xlu0 %784
      %787 = vst.msk [vmem:[#allocation2 + $0xc] sm:$0xf] %vm746, %v785
      %v792 = vrot.slane %v771, 7
      %v793 = vsel %vm505, %v792, %v770
      %v794 = vrot.slane %v772, 6
      %v795 = vsel %vm508, %v794, %v793
      %v796 = vrot.slane %v773, 5
      %v797 = vsel %vm511, %v796, %v795
      %798 = vrot.lane.b32.xlu0 %v797, 16
      %v799 = vpop.permute.xlu0 %798
      %801 = vst.msk [vmem:[#allocation2 + $0x10] sm:$0xf] %vm746, %v799
      %802 = vrot.lane.b32.xlu0 %v783, 15
      %v803 = vpop.permute.xlu0 %802
      %805 = vst.msk [vmem:[#allocation2 + $0x14] sm:$0xf] %vm746, %v803
      %v806 = vld [vmem:[%s474 + $0x2] sm:$0x1]
      %v807 = vld [vmem:[%s474 + $0xa] sm:$0x1]
      %v808 = vld [vmem:[%s474 + $0x12] sm:$0x1]
      %v809 = vld [vmem:[%s474 + $0x1a] sm:$0x1]
      %v810 = vld [vmem:[%s482 + $0x2] sm:$0x1]
      %v811 = vld [vmem:[%s482 + $0xa] sm:$0x1]
      %v812 = vld [vmem:[%s482 + $0x12] sm:$0x1]
      %v813 = vld [vmem:[%s482 + $0x1a] sm:$0x1]
      %v818 = vrot.slane %v807, 7
      %v819 = vsel %vm505, %v818, %v806
      %v820 = vrot.slane %v808, 6
      %v821 = vsel %vm508, %v820, %v819
      %v822 = vrot.slane %v809, 5
      %v823 = vsel %vm511, %v822, %v821
      %824 = vrot.lane.b32.xlu0 %v823, 16
      %v825 = vpop.permute.xlu0 %824
      %827 = vst.msk [vmem:[#allocation2 + $0x18] sm:$0xf] %vm746, %v825
      %v832 = vrot.slane %v811, 7
      %v833 = vsel %vm505, %v832, %v810
      %v834 = vrot.slane %v812, 6
      %v835 = vsel %vm508, %v834, %v833
      %v836 = vrot.slane %v813, 5
      %v837 = vsel %vm511, %v836, %v835
      %838 = vrot.lane.b32.xlu0 %v837, 16
      %v839 = vpop.permute.xlu0 %838
      %841 = vst.msk [vmem:[#allocation2 + $0x1c] sm:$0xf] %vm746, %v839
      %842 = vrot.lane.b32.xlu0 %v823, 15
      %v843 = vpop.permute.xlu0 %842
      %845 = vst.msk [vmem:[#allocation2 + $0x20] sm:$0xf] %vm746, %v843
      %v846 = vld [vmem:[%s442 + $0x3] sm:$0x1]
      %v847 = vld [vmem:[%s442 + $0xb] sm:$0x1]
      %v848 = vld [vmem:[%s442 + $0x13] sm:$0x1]
      %v849 = vld [vmem:[%s442 + $0x1b] sm:$0x1]
      %v850 = vld [vmem:[%s450 + $0x3] sm:$0x1]
      %v851 = vld [vmem:[%s450 + $0xb] sm:$0x1]
      %v852 = vld [vmem:[%s450 + $0x13] sm:$0x1]
      %v853 = vld [vmem:[%s450 + $0x1b] sm:$0x1]
      %v858 = vrot.slane %v847, 7
      %v859 = vsel %vm505, %v858, %v846
      %v860 = vrot.slane %v848, 6
      %v861 = vsel %vm508, %v860, %v859
      %v862 = vrot.slane %v849, 5
      %v863 = vsel %vm511, %v862, %v861
      %864 = vrot.lane.b32.xlu0 %v863, 24
      %v865 = vpop.permute.xlu0 %864
      %vm867 = vcmask 257216
      %868 = vst.msk [vmem:[#allocation2] sm:$0xf] %vm867, %v865
      %v873 = vrot.slane %v851, 7
      %v874 = vsel %vm505, %v873, %v850
      %v875 = vrot.slane %v852, 6
      %v876 = vsel %vm508, %v875, %v874
      %v877 = vrot.slane %v853, 5
      %v878 = vsel %vm511, %v877, %v876
      %879 = vrot.lane.b32.xlu0 %v878, 24
      %v880 = vpop.permute.xlu0 %879
      %882 = vst.msk [vmem:[#allocation2 + $0x4] sm:$0xf] %vm867, %v880
      %883 = vrot.lane.b32.xlu0 %v863, 23
      %v884 = vpop.permute.xlu0 %883
      %886 = vst.msk [vmem:[#allocation2 + $0x8] sm:$0xf] %vm867, %v884
      %v887 = vld [vmem:[%s458 + $0x3] sm:$0x1]
      %v888 = vld [vmem:[%s458 + $0xb] sm:$0x1]
      %v889 = vld [vmem:[%s458 + $0x13] sm:$0x1]
      %v890 = vld [vmem:[%s458 + $0x1b] sm:$0x1]
      %v891 = vld [vmem:[%s466 + $0x3] sm:$0x1]
      %v892 = vld [vmem:[%s466 + $0xb] sm:$0x1]
      %v893 = vld [vmem:[%s466 + $0x13] sm:$0x1]
      %v894 = vld [vmem:[%s466 + $0x1b] sm:$0x1]
      %v899 = vrot.slane %v888, 7
      %v900 = vsel %vm505, %v899, %v887
      %v901 = vrot.slane %v889, 6
      %v902 = vsel %vm508, %v901, %v900
      %v903 = vrot.slane %v890, 5
      %v904 = vsel %vm511, %v903, %v902
      %905 = vrot.lane.b32.xlu0 %v904, 24
      %v906 = vpop.permute.xlu0 %905
      %908 = vst.msk [vmem:[#allocation2 + $0xc] sm:$0xf] %vm867, %v906
      %v913 = vrot.slane %v892, 7
      %v914 = vsel %vm505, %v913, %v891
      %v915 = vrot.slane %v893, 6
      %v916 = vsel %vm508, %v915, %v914
      %v917 = vrot.slane %v894, 5
      %v918 = vsel %vm511, %v917, %v916
      %919 = vrot.lane.b32.xlu0 %v918, 24
      %v920 = vpop.permute.xlu0 %919
      %922 = vst.msk [vmem:[#allocation2 + $0x10] sm:$0xf] %vm867, %v920
      %923 = vrot.lane.b32.xlu0 %v904, 23
      %v924 = vpop.permute.xlu0 %923
      %926 = vst.msk [vmem:[#allocation2 + $0x14] sm:$0xf] %vm867, %v924
      %v927 = vld [vmem:[%s474 + $0x3] sm:$0x1]
      %v928 = vld [vmem:[%s474 + $0xb] sm:$0x1]
      %v929 = vld [vmem:[%s474 + $0x13] sm:$0x1]
      %v930 = vld [vmem:[%s474 + $0x1b] sm:$0x1]
      %v931 = vld [vmem:[%s482 + $0x3] sm:$0x1]
      %v932 = vld [vmem:[%s482 + $0xb] sm:$0x1]
      %v933 = vld [vmem:[%s482 + $0x13] sm:$0x1]
      %v934 = vld [vmem:[%s482 + $0x1b] sm:$0x1]
      %v939 = vrot.slane %v928, 7
      %v940 = vsel %vm505, %v939, %v927
      %v941 = vrot.slane %v929, 6
      %v942 = vsel %vm508, %v941, %v940
      %v943 = vrot.slane %v930, 5
      %v944 = vsel %vm511, %v943, %v942
      %945 = vrot.lane.b32.xlu0 %v944, 24
      %v946 = vpop.permute.xlu0 %945
      %948 = vst.msk [vmem:[#allocation2 + $0x18] sm:$0xf] %vm867, %v946
      %v953 = vrot.slane %v932, 7
      %v954 = vsel %vm505, %v953, %v931
      %v955 = vrot.slane %v933, 6
      %v956 = vsel %vm508, %v955, %v954
      %v957 = vrot.slane %v934, 5
      %v958 = vsel %vm511, %v957, %v956
      %959 = vrot.lane.b32.xlu0 %v958, 24
      %v960 = vpop.permute.xlu0 %959
      %962 = vst.msk [vmem:[#allocation2 + $0x1c] sm:$0xf] %vm867, %v960
      %963 = vrot.lane.b32.xlu0 %v944, 23
      %v964 = vpop.permute.xlu0 %963
      %966 = vst.msk [vmem:[#allocation2 + $0x20] sm:$0xf] %vm867, %v964
      %v967 = vld [vmem:[%s442 + $0x4] sm:$0x1]
      %v968 = vld [vmem:[%s442 + $0xc] sm:$0x1]
      %v969 = vld [vmem:[%s442 + $0x14] sm:$0x1]
      %v970 = vld [vmem:[%s442 + $0x1c] sm:$0x1]
      %v971 = vld [vmem:[%s450 + $0x4] sm:$0x1]
      %v972 = vld [vmem:[%s450 + $0xc] sm:$0x1]
      %v973 = vld [vmem:[%s450 + $0x14] sm:$0x1]
      %v974 = vld [vmem:[%s450 + $0x1c] sm:$0x1]
      %v979 = vrot.slane %v968, 7
      %v980 = vsel %vm505, %v979, %v967
      %v981 = vrot.slane %v969, 6
      %v982 = vsel %vm508, %v981, %v980
      %v983 = vrot.slane %v970, 5
      %v984 = vsel %vm511, %v983, %v982
      %985 = vrot.lane.b32.xlu0 %v984, 32
      %v986 = vpop.permute.xlu0 %985
      %vm988 = vcmask 322816
      %989 = vst.msk [vmem:[#allocation2] sm:$0xf] %vm988, %v986
      %v994 = vrot.slane %v972, 7
      %v995 = vsel %vm505, %v994, %v971
      %v996 = vrot.slane %v973, 6
      %v997 = vsel %vm508, %v996, %v995
      %v998 = vrot.slane %v974, 5
      %v999 = vsel %vm511, %v998, %v997
      %1000 = vrot.lane.b32.xlu0 %v999, 32
      %v1001 = vpop.permute.xlu0 %1000
      %1003 = vst.msk [vmem:[#allocation2 + $0x4] sm:$0xf] %vm988, %v1001
      %1004 = vrot.lane.b32.xlu0 %v984, 31
      %v1005 = vpop.permute.xlu0 %1004
      %1007 = vst.msk [vmem:[#allocation2 + $0x8] sm:$0xf] %vm988, %v1005
      %v1008 = vld [vmem:[%s458 + $0x4] sm:$0x1]
      %v1009 = vld [vmem:[%s458 + $0xc] sm:$0x1]
      %v1010 = vld [vmem:[%s458 + $0x14] sm:$0x1]
      %v1011 = vld [vmem:[%s458 + $0x1c] sm:$0x1]
      %v1012 = vld [vmem:[%s466 + $0x4] sm:$0x1]
      %v1013 = vld [vmem:[%s466 + $0xc] sm:$0x1]
      %v1014 = vld [vmem:[%s466 + $0x14] sm:$0x1]
      %v1015 = vld [vmem:[%s466 + $0x1c] sm:$0x1]
      %v1020 = vrot.slane %v1009, 7
      %v1021 = vsel %vm505, %v1020, %v1008
      %v1022 = vrot.slane %v1010, 6
      %v1023 = vsel %vm508, %v1022, %v1021
      %v1024 = vrot.slane %v1011, 5
      %v1025 = vsel %vm511, %v1024, %v1023
      %1026 = vrot.lane.b32.xlu0 %v1025, 32
      %v1027 = vpop.permute.xlu0 %1026
      %1029 = vst.msk [vmem:[#allocation2 + $0xc] sm:$0xf] %vm988, %v1027
      %v1034 = vrot.slane %v1013, 7
      %v1035 = vsel %vm505, %v1034, %v1012
      %v1036 = vrot.slane %v1014, 6
      %v1037 = vsel %vm508, %v1036, %v1035
      %v1038 = vrot.slane %v1015, 5
      %v1039 = vsel %vm511, %v1038, %v1037
      %1040 = vrot.lane.b32.xlu0 %v1039, 32
      %v1041 = vpop.permute.xlu0 %1040
      %1043 = vst.msk [vmem:[#allocation2 + $0x10] sm:$0xf] %vm988, %v1041
      %1044 = vrot.lane.b32.xlu0 %v1025, 31
      %v1045 = vpop.permute.xlu0 %1044
      %1047 = vst.msk [vmem:[#allocation2 + $0x14] sm:$0xf] %vm988, %v1045
      %v1048 = vld [vmem:[%s474 + $0x4] sm:$0x1]
      %v1049 = vld [vmem:[%s474 + $0xc] sm:$0x1]
      %v1050 = vld [vmem:[%s474 + $0x14] sm:$0x1]
      %v1051 = vld [vmem:[%s474 + $0x1c] sm:$0x1]
      %v1052 = vld [vmem:[%s482 + $0x4] sm:$0x1]
      %v1053 = vld [vmem:[%s482 + $0xc] sm:$0x1]
      %v1054 = vld [vmem:[%s482 + $0x14] sm:$0x1]
      %v1055 = vld [vmem:[%s482 + $0x1c] sm:$0x1]
      %v1060 = vrot.slane %v1049, 7
      %v1061 = vsel %vm505, %v1060, %v1048
      %v1062 = vrot.slane %v1050, 6
      %v1063 = vsel %vm508, %v1062, %v1061
      %v1064 = vrot.slane %v1051, 5
      %v1065 = vsel %vm511, %v1064, %v1063
      %1066 = vrot.lane.b32.xlu0 %v1065, 32
      %v1067 = vpop.permute.xlu0 %1066
      %1069 = vst.msk [vmem:[#allocation2 + $0x18] sm:$0xf] %vm988, %v1067
      %v1074 = vrot.slane %v1053, 7
      %v1075 = vsel %vm505, %v1074, %v1052
      %v1076 = vrot.slane %v1054, 6
      %v1077 = vsel %vm508, %v1076, %v1075
      %v1078 = vrot.slane %v1055, 5
      %v1079 = vsel %vm511, %v1078, %v1077
      %1080 = vrot.lane.b32.xlu0 %v1079, 32
      %v1081 = vpop.permute.xlu0 %1080
      %1083 = vst.msk [vmem:[#allocation2 + $0x1c] sm:$0xf] %vm988, %v1081
      %1084 = vrot.lane.b32.xlu0 %v1065, 31
      %v1085 = vpop.permute.xlu0 %1084
      %1087 = vst.msk [vmem:[#allocation2 + $0x20] sm:$0xf] %vm988, %v1085
      %v1088 = vld [vmem:[%s442 + $0x5] sm:$0x1]
      %v1089 = vld [vmem:[%s442 + $0xd] sm:$0x1]
      %v1090 = vld [vmem:[%s442 + $0x15] sm:$0x1]
      %v1091 = vld [vmem:[%s442 + $0x1d] sm:$0x1]
      %v1092 = vld [vmem:[%s450 + $0x5] sm:$0x1]
      %v1093 = vld [vmem:[%s450 + $0xd] sm:$0x1]
      %v1094 = vld [vmem:[%s450 + $0x15] sm:$0x1]
      %v1095 = vld [vmem:[%s450 + $0x1d] sm:$0x1]
      %v1100 = vrot.slane %v1089, 7
      %v1101 = vsel %vm505, %v1100, %v1088
      %v1102 = vrot.slane %v1090, 6
      %v1103 = vsel %vm508, %v1102, %v1101
      %v1104 = vrot.slane %v1091, 5
      %v1105 = vsel %vm511, %v1104, %v1103
      %1106 = vrot.lane.b32.xlu0 %v1105, 40
      %v1107 = vpop.permute.xlu0 %1106
      %vm1109 = vcmask 388416
      %1110 = vst.msk [vmem:[#allocation2] sm:$0xf] %vm1109, %v1107
      %v1115 = vrot.slane %v1093, 7
      %v1116 = vsel %vm505, %v1115, %v1092
      %v1117 = vrot.slane %v1094, 6
      %v1118 = vsel %vm508, %v1117, %v1116
      %v1119 = vrot.slane %v1095, 5
      %v1120 = vsel %vm511, %v1119, %v1118
      %1121 = vrot.lane.b32.xlu0 %v1120, 40
      %v1122 = vpop.permute.xlu0 %1121
      %1124 = vst.msk [vmem:[#allocation2 + $0x4] sm:$0xf] %vm1109, %v1122
      %1125 = vrot.lane.b32.xlu0 %v1105, 39
      %v1126 = vpop.permute.xlu0 %1125
      %1128 = vst.msk [vmem:[#allocation2 + $0x8] sm:$0xf] %vm1109, %v1126
      %v1129 = vld [vmem:[%s458 + $0x5] sm:$0x1]
      %v1130 = vld [vmem:[%s458 + $0xd] sm:$0x1]
      %v1131 = vld [vmem:[%s458 + $0x15] sm:$0x1]
      %v1132 = vld [vmem:[%s458 + $0x1d] sm:$0x1]
      %v1133 = vld [vmem:[%s466 + $0x5] sm:$0x1]
      %v1134 = vld [vmem:[%s466 + $0xd] sm:$0x1]
      %v1135 = vld [vmem:[%s466 + $0x15] sm:$0x1]
      %v1136 = vld [vmem:[%s466 + $0x1d] sm:$0x1]
      %v1141 = vrot.slane %v1130, 7
      %v1142 = vsel %vm505, %v1141, %v1129
      %v1143 = vrot.slane %v1131, 6
      %v1144 = vsel %vm508, %v1143, %v1142
      %v1145 = vrot.slane %v1132, 5
      %v1146 = vsel %vm511, %v1145, %v1144
      %1147 = vrot.lane.b32.xlu0 %v1146, 40
      %v1148 = vpop.permute.xlu0 %1147
      %1150 = vst.msk [vmem:[#allocation2 + $0xc] sm:$0xf] %vm1109, %v1148
      %v1155 = vrot.slane %v1134, 7
      %v1156 = vsel %vm505, %v1155, %v1133
      %v1157 = vrot.slane %v1135, 6
      %v1158 = vsel %vm508, %v1157, %v1156
      %v1159 = vrot.slane %v1136, 5
      %v1160 = vsel %vm511, %v1159, %v1158
      %1161 = vrot.lane.b32.xlu0 %v1160, 40
      %v1162 = vpop.permute.xlu0 %1161
      %1164 = vst.msk [vmem:[#allocation2 + $0x10] sm:$0xf] %vm1109, %v1162
      %1165 = vrot.lane.b32.xlu0 %v1146, 39
      %v1166 = vpop.permute.xlu0 %1165
      %1168 = vst.msk [vmem:[#allocation2 + $0x14] sm:$0xf] %vm1109, %v1166
      %v1169 = vld [vmem:[%s474 + $0x5] sm:$0x1]
      %v1170 = vld [vmem:[%s474 + $0xd] sm:$0x1]
      %v1171 = vld [vmem:[%s474 + $0x15] sm:$0x1]
      %v1172 = vld [vmem:[%s474 + $0x1d] sm:$0x1]
      %v1173 = vld [vmem:[%s482 + $0x5] sm:$0x1]
      %v1174 = vld [vmem:[%s482 + $0xd] sm:$0x1]
      %v1175 = vld [vmem:[%s482 + $0x15] sm:$0x1]
      %v1176 = vld [vmem:[%s482 + $0x1d] sm:$0x1]
      %v1181 = vrot.slane %v1170, 7
      %v1182 = vsel %vm505, %v1181, %v1169
      %v1183 = vrot.slane %v1171, 6
      %v1184 = vsel %vm508, %v1183, %v1182
      %v1185 = vrot.slane %v1172, 5
      %v1186 = vsel %vm511, %v1185, %v1184
      %1187 = vrot.lane.b32.xlu0 %v1186, 40
      %v1188 = vpop.permute.xlu0 %1187
      %1190 = vst.msk [vmem:[#allocation2 + $0x18] sm:$0xf] %vm1109, %v1188
      %v1195 = vrot.slane %v1174, 7
      %v1196 = vsel %vm505, %v1195, %v1173
      %v1197 = vrot.slane %v1175, 6
      %v1198 = vsel %vm508, %v1197, %v1196
      %v1199 = vrot.slane %v1176, 5
      %v1200 = vsel %vm511, %v1199, %v1198
      %1201 = vrot.lane.b32.xlu0 %v1200, 40
      %v1202 = vpop.permute.xlu0 %1201
      %1204 = vst.msk [vmem:[#allocation2 + $0x1c] sm:$0xf] %vm1109, %v1202
      %1205 = vrot.lane.b32.xlu0 %v1186, 39
      %v1206 = vpop.permute.xlu0 %1205
      %1208 = vst.msk [vmem:[#allocation2 + $0x20] sm:$0xf] %vm1109, %v1206
      %v1209 = vld [vmem:[%s442 + $0x6] sm:$0x1]
      %v1210 = vld [vmem:[%s442 + $0xe] sm:$0x1]
      %v1211 = vld [vmem:[%s442 + $0x16] sm:$0x1]
      %v1212 = vld [vmem:[%s442 + $0x1e] sm:$0x1]
      %v1213 = vld [vmem:[%s450 + $0x6] sm:$0x1]
      %v1214 = vld [vmem:[%s450 + $0xe] sm:$0x1]
      %v1215 = vld [vmem:[%s450 + $0x16] sm:$0x1]
      %v1216 = vld [vmem:[%s450 + $0x1e] sm:$0x1]
      %v1221 = vrot.slane %v1210, 7
      %v1222 = vsel %vm505, %v1221, %v1209
      %v1223 = vrot.slane %v1211, 6
      %v1224 = vsel %vm508, %v1223, %v1222
      %v1225 = vrot.slane %v1212, 5
      %v1226 = vsel %vm511, %v1225, %v1224
      %1227 = vrot.lane.b32.xlu0 %v1226, 48
      %v1228 = vpop.permute.xlu0 %1227
      %vm1230 = vcmask 454016
      %1231 = vst.msk [vmem:[#allocation2] sm:$0xf] %vm1230, %v1228
      %v1236 = vrot.slane %v1214, 7
      %v1237 = vsel %vm505, %v1236, %v1213
      %v1238 = vrot.slane %v1215, 6
      %v1239 = vsel %vm508, %v1238, %v1237
      %v1240 = vrot.slane %v1216, 5
      %v1241 = vsel %vm511, %v1240, %v1239
      %1242 = vrot.lane.b32.xlu0 %v1241, 48
      %v1243 = vpop.permute.xlu0 %1242
      %1245 = vst.msk [vmem:[#allocation2 + $0x4] sm:$0xf] %vm1230, %v1243
      %1246 = vrot.lane.b32.xlu0 %v1226, 47
      %v1247 = vpop.permute.xlu0 %1246
      %1249 = vst.msk [vmem:[#allocation2 + $0x8] sm:$0xf] %vm1230, %v1247
      %v1250 = vld [vmem:[%s458 + $0x6] sm:$0x1]
      %v1251 = vld [vmem:[%s458 + $0xe] sm:$0x1]
      %v1252 = vld [vmem:[%s458 + $0x16] sm:$0x1]
      %v1253 = vld [vmem:[%s458 + $0x1e] sm:$0x1]
      %v1254 = vld [vmem:[%s466 + $0x6] sm:$0x1]
      %v1255 = vld [vmem:[%s466 + $0xe] sm:$0x1]
      %v1256 = vld [vmem:[%s466 + $0x16] sm:$0x1]
      %v1257 = vld [vmem:[%s466 + $0x1e] sm:$0x1]
      %v1262 = vrot.slane %v1251, 7
      %v1263 = vsel %vm505, %v1262, %v1250
      %v1264 = vrot.slane %v1252, 6
      %v1265 = vsel %vm508, %v1264, %v1263
      %v1266 = vrot.slane %v1253, 5
      %v1267 = vsel %vm511, %v1266, %v1265
      %1268 = vrot.lane.b32.xlu0 %v1267, 48
      %v1269 = vpop.permute.xlu0 %1268
      %1271 = vst.msk [vmem:[#allocation2 + $0xc] sm:$0xf] %vm1230, %v1269
      %v1276 = vrot.slane %v1255, 7
      %v1277 = vsel %vm505, %v1276, %v1254
      %v1278 = vrot.slane %v1256, 6
      %v1279 = vsel %vm508, %v1278, %v1277
      %v1280 = vrot.slane %v1257, 5
      %v1281 = vsel %vm511, %v1280, %v1279
      %1282 = vrot.lane.b32.xlu0 %v1281, 48
      %v1283 = vpop.permute.xlu0 %1282
      %1285 = vst.msk [vmem:[#allocation2 + $0x10] sm:$0xf] %vm1230, %v1283
      %1286 = vrot.lane.b32.xlu0 %v1267, 47
      %v1287 = vpop.permute.xlu0 %1286
      %1289 = vst.msk [vmem:[#allocation2 + $0x14] sm:$0xf] %vm1230, %v1287
      %v1290 = vld [vmem:[%s474 + $0x6] sm:$0x1]
      %v1291 = vld [vmem:[%s474 + $0xe] sm:$0x1]
      %v1292 = vld [vmem:[%s474 + $0x16] sm:$0x1]
      %v1293 = vld [vmem:[%s474 + $0x1e] sm:$0x1]
      %v1294 = vld [vmem:[%s482 + $0x6] sm:$0x1]
      %v1295 = vld [vmem:[%s482 + $0xe] sm:$0x1]
      %v1296 = vld [vmem:[%s482 + $0x16] sm:$0x1]
      %v1297 = vld [vmem:[%s482 + $0x1e] sm:$0x1]
      %v1302 = vrot.slane %v1291, 7
      %v1303 = vsel %vm505, %v1302, %v1290
      %v1304 = vrot.slane %v1292, 6
      %v1305 = vsel %vm508, %v1304, %v1303
      %v1306 = vrot.slane %v1293, 5
      %v1307 = vsel %vm511, %v1306, %v1305
      %1308 = vrot.lane.b32.xlu0 %v1307, 48
      %v1309 = vpop.permute.xlu0 %1308
      %1311 = vst.msk [vmem:[#allocation2 + $0x18] sm:$0xf] %vm1230, %v1309
      %v1316 = vrot.slane %v1295, 7
      %v1317 = vsel %vm505, %v1316, %v1294
      %v1318 = vrot.slane %v1296, 6
      %v1319 = vsel %vm508, %v1318, %v1317
      %v1320 = vrot.slane %v1297, 5
      %v1321 = vsel %vm511, %v1320, %v1319
      %1322 = vrot.lane.b32.xlu0 %v1321, 48
      %v1323 = vpop.permute.xlu0 %1322
      %1325 = vst.msk [vmem:[#allocation2 + $0x1c] sm:$0xf] %vm1230, %v1323
      %1326 = vrot.lane.b32.xlu0 %v1307, 47
      %v1327 = vpop.permute.xlu0 %1326
      %1329 = vst.msk [vmem:[#allocation2 + $0x20] sm:$0xf] %vm1230, %v1327
      %v1330 = vld [vmem:[%s442 + $0x7] sm:$0x1]
      %v1331 = vld [vmem:[%s442 + $0xf] sm:$0x1]
      %v1332 = vld [vmem:[%s442 + $0x17] sm:$0x1]
      %v1333 = vld [vmem:[%s442 + $0x1f] sm:$0x1]
      %v1334 = vld [vmem:[%s450 + $0x7] sm:$0x1]
      %v1335 = vld [vmem:[%s450 + $0xf] sm:$0x1]
      %v1336 = vld [vmem:[%s450 + $0x17] sm:$0x1]
      %v1337 = vld [vmem:[%s450 + $0x1f] sm:$0x1]
      %v1342 = vrot.slane %v1331, 7
      %v1343 = vsel %vm505, %v1342, %v1330
      %v1344 = vrot.slane %v1332, 6
      %v1345 = vsel %vm508, %v1344, %v1343
      %v1346 = vrot.slane %v1333, 5
      %v1347 = vsel %vm511, %v1346, %v1345
      %1348 = vrot.lane.b32.xlu0 %v1347, 56
      %v1349 = vpop.permute.xlu0 %1348
      %vm1351 = vcmask 519616
      %1352 = vst.msk [vmem:[#allocation2] sm:$0xf] %vm1351, %v1349
      %v1357 = vrot.slane %v1335, 7
      %v1358 = vsel %vm505, %v1357, %v1334
      %v1359 = vrot.slane %v1336, 6
      %v1360 = vsel %vm508, %v1359, %v1358
      %v1361 = vrot.slane %v1337, 5
      %v1362 = vsel %vm511, %v1361, %v1360
      %1363 = vrot.lane.b32.xlu0 %v1362, 56
      %v1364 = vpop.permute.xlu0 %1363
      %1366 = vst.msk [vmem:[#allocation2 + $0x4] sm:$0xf] %vm1351, %v1364
      %1367 = vrot.lane.b32.xlu0 %v1347, 55
      %v1368 = vpop.permute.xlu0 %1367
      %1370 = vst.msk [vmem:[#allocation2 + $0x8] sm:$0xf] %vm1351, %v1368
      %v1371 = vld [vmem:[%s458 + $0x7] sm:$0x1]
      %v1372 = vld [vmem:[%s458 + $0xf] sm:$0x1]
      %v1373 = vld [vmem:[%s458 + $0x17] sm:$0x1]
      %v1374 = vld [vmem:[%s458 + $0x1f] sm:$0x1]
      %v1375 = vld [vmem:[%s466 + $0x7] sm:$0x1]
      %v1376 = vld [vmem:[%s466 + $0xf] sm:$0x1]
      %v1377 = vld [vmem:[%s466 + $0x17] sm:$0x1]
      %v1378 = vld [vmem:[%s466 + $0x1f] sm:$0x1]
      %v1383 = vrot.slane %v1372, 7
      %v1384 = vsel %vm505, %v1383, %v1371
      %v1385 = vrot.slane %v1373, 6
      %v1386 = vsel %vm508, %v1385, %v1384
      %v1387 = vrot.slane %v1374, 5
      %v1388 = vsel %vm511, %v1387, %v1386
      %1389 = vrot.lane.b32.xlu0 %v1388, 56
      %v1390 = vpop.permute.xlu0 %1389
      %1392 = vst.msk [vmem:[#allocation2 + $0xc] sm:$0xf] %vm1351, %v1390
      %v1397 = vrot.slane %v1376, 7
      %v1398 = vsel %vm505, %v1397, %v1375
      %v1399 = vrot.slane %v1377, 6
      %v1400 = vsel %vm508, %v1399, %v1398
      %v1401 = vrot.slane %v1378, 5
      %v1402 = vsel %vm511, %v1401, %v1400
      %1403 = vrot.lane.b32.xlu0 %v1402, 56
      %v1404 = vpop.permute.xlu0 %1403
      %1406 = vst.msk [vmem:[#allocation2 + $0x10] sm:$0xf] %vm1351, %v1404
      %1407 = vrot.lane.b32.xlu0 %v1388, 55
      %v1408 = vpop.permute.xlu0 %1407
      %1410 = vst.msk [vmem:[#allocation2 + $0x14] sm:$0xf] %vm1351, %v1408
      %v1411 = vld [vmem:[%s474 + $0x7] sm:$0x1]
      %v1412 = vld [vmem:[%s474 + $0xf] sm:$0x1]
      %v1413 = vld [vmem:[%s474 + $0x17] sm:$0x1]
      %v1414 = vld [vmem:[%s474 + $0x1f] sm:$0x1]
      %v1415 = vld [vmem:[%s482 + $0x7] sm:$0x1]
      %v1416 = vld [vmem:[%s482 + $0xf] sm:$0x1]
      %v1417 = vld [vmem:[%s482 + $0x17] sm:$0x1]
      %v1418 = vld [vmem:[%s482 + $0x1f] sm:$0x1]
      %v1423 = vrot.slane %v1412, 7
      %v1424 = vsel %vm505, %v1423, %v1411
      %v1425 = vrot.slane %v1413, 6
      %v1426 = vsel %vm508, %v1425, %v1424
      %v1427 = vrot.slane %v1414, 5
      %v1428 = vsel %vm511, %v1427, %v1426
      %1429 = vrot.lane.b32.xlu0 %v1428, 56
      %v1430 = vpop.permute.xlu0 %1429
      %1432 = vst.msk [vmem:[#allocation2 + $0x18] sm:$0xf] %vm1351, %v1430
      %v1437 = vrot.slane %v1416, 7
      %v1438 = vsel %vm505, %v1437, %v1415
      %v1439 = vrot.slane %v1417, 6
      %v1440 = vsel %vm508, %v1439, %v1438
      %v1441 = vrot.slane %v1418, 5
      %v1442 = vsel %vm511, %v1441, %v1440
      %1443 = vrot.lane.b32.xlu0 %v1442, 56
      %v1444 = vpop.permute.xlu0 %1443
      %1446 = vst.msk [vmem:[#allocation2 + $0x1c] sm:$0xf] %vm1351, %v1444
      %1447 = vrot.lane.b32.xlu0 %v1428, 55
      %v1448 = vpop.permute.xlu0 %1447
      %1450 = vst.msk [vmem:[#allocation2 + $0x20] sm:$0xf] %vm1351, %v1448
      %v1451 = vld [vmem:[%s6] sm:$0xff]
      %v1452 = vld [vmem:[#allocation2] sm:$0xff]
      %v1453 = vld [vmem:[#allocation2 + $0x8] sm:$0xff]
      %v1454 = vld [vmem:[#allocation2 + $0x10] sm:$0xff]
      %v1455 = vld [vmem:[#allocation2 + $0x18] sm:$0xff]
      %v1456 = vld [vmem:[#allocation2 + $0x20] sm:$0xff]
      %v1457 = vld [vmem:[%s7] sm:$0xff]
      %1459 = vset.pattern.permute.xlu0 0
      %1460 = vperm.xlu0 %1459, %v1457
      %v1461 = vpop.permute.xlu0 %1460
      %vm1463 = vcmask 326656
      %v1465 = vsel %vm1463, %v1451, 0
      %1467 = vmatpush.msra.mxu0 0.0
      %1468 = vmatpush.msra.mxu0 0.0
      %1469 = vmatpush.msra.mxu0 0.0
      %1470 = vmatpush.msra.mxu0 0.0
      %1471 = vmatpush.msra.mxu0 0.0
      %1472 = vmatpush.msra.mxu0 0.0
      %1473 = vmatpush.msra.mxu0 0.0
      %1474 = vmatpush.msra.mxu0 0.0
      %1475 = vmatpush.msra.mxu0 0.0
      %1476 = vmatpush.msra.mxu0 0.0
      %1477 = vmatpush.msra.mxu0 0.0
      %1478 = vmatpush.msra.mxu0 %v1456
      %1479 = vmatpush.msra.mxu0 %v1455
      %1480 = vmatpush.msra.mxu0 %v1454
      %1481 = vmatpush.msra.mxu0 %v1453
      %1482 = vmatpush.msra.mxu0 %v1452
      %1483 = vmatmul.f32.gmra.mxu0 %v1465
      %v1484 = vpop.f32.mrf.mxu0
      %v1485 = vadd.f32 %v1461, %v1484
      %1486 = vdwg.mxu0
      %v1487 = vmax.f32 %v1485, 0.0
      %vm1488 = vcmask 523264
      %1489 = vst.msk [vmem:[%s489] sm:$0xff] %vm1488, %v1487
      %p1490 = scmp.lt.s32.totalorder %s23, 1
      %s1491 = scalar_select %p1490, %s23, 1
      %p1492 = scmp.lt.s32.totalorder %s24, 0
      %s1493 = scalar_select %p1492, %s24, 0
      %s1494 = sadd.s32 %s1493, %s1491
      %s1495 = smul.addr %s1494, 8
      %s1496 = scalar_lea.vmem %s8, %s1495
      // Predicated region
      $region53: #{_lambda_.1} parent=51 // pred_check
        %p1497 = pneg %p261
      $region54: #{_lambda_.1} parent=51 // pred_check_branch
        %1499 = sbr.rel (%p1497) target = $region56
      $region55: #{_lambda_.1} parent=51 // pred_region
        _
      $region56: #{_lambda_.1} parent=51 // pred_fallthru
        _
    $region52: #{_lambda_.1} parent=5 // pred_fallthru
      _
    %p1500 = scmp.le.s32.totalorder 2, %s14
    // Predicated region
    $region57: #{_lambda_.1} parent=5 // pred_check
      %p1501 = pneg %p1500
    $region58: #{_lambda_.1} parent=5 // pred_check_branch
      %1503 = sbr.rel (%p1501) target = $region60
    $region59: #{_lambda_.1} parent=5 // pred_region
      %s1504 = ssub.s32 %s14, 2
      // Predicated region
      $region61: #{_lambda_.1} parent=59 // pred_check
        %p1505 = pneg %p267
      $region62: #{_lambda_.1} parent=59 // pred_check_branch
        %1507 = sbr.rel (%p1505) target = $region64
      $region63: #{_lambda_.1} parent=59 // pred_region
        %p1508 = scmp.lt.s32.totalorder %s25, 1
        %s1509 = scalar_select %p1508, %s25, 1
        %p1510 = scmp.lt.s32.totalorder %s26, 0
        %s1511 = scalar_select %p1510, %s26, 0
        %s1512 = sadd.s32 %s1511, %s1509
        %s1513 = smul.addr %s1512, 8
        %s1514 = scalar_lea.vmem %s8, %s1513
      $region64: #{_lambda_.1} parent=59 // pred_fallthru
        _
    $region60: #{_lambda_.1} parent=5 // pred_fallthru
      _
  $region6: #{_lambda_.1} parent=0 // loop_footer
    %s18 = sadd.s32 1, %s14
  $region7: #{_lambda_.1} parent=0 // loop_footer_branch
    %13 = sbr.rel target = $region3
  $region8: #{_lambda_.1} parent=0 // loop_exit
    _

</llo_original>
